<compile_context>
chip_gen: v6e
topology: v6e:2x2x1
jax: 0.10.0
libtpu: 0.0.40
codegen_flags: <defaults>
</compile_context>

<pallas_src>
import jax
import jax.numpy as jnp
from jax.experimental import pallas as pl
from jax.experimental.pallas import tpu as pltpu

IN_FEATURES = 3 * 32 * 32   # 3072
H1 = 128                    # fc1 out
H2 = 64                     # fc2 out (lane-padded to 128 inside the kernel)
OUT = 10                    # fc3 out (lane-padded to 128 inside the kernel)
LANE = 128                  # TPU lane width


def mlp_kernel(x_ref, w1_ref, b1_ref, w2_ref, b2_ref, w3_ref, b3_ref, o_ref):
    # Per-tile bf16 cast of x (overlapped with the DMA pipeline) instead of a
    # separate wrapper-side HBM pass over x.
    x = x_ref[...].astype(jnp.bfloat16)
    # fc1 + ReLU : (TB, 3072)bf16 @ (3072, 128)bf16 -> (TB, 128) f32 acc (MXU)
    h1 = jnp.dot(x, w1_ref[...], preferred_element_type=jnp.float32)
    h1 = jnp.maximum(h1 + b1_ref[...], 0.0)
    # (drop1: identity in eval mode)
    # fc2 + ReLU : (TB, 128) @ (128, 128-padded) -> (TB, 128); lanes >= 64 stay 0
    h2 = jnp.dot(h1.astype(w2_ref.dtype), w2_ref[...],
                 preferred_element_type=jnp.float32)
    h2 = jnp.maximum(h2 + b2_ref[...], 0.0)
    # (drop2: identity in eval mode)
    # fc3 : (TB, 128) @ (128, 128-padded) -> (TB, 128); lanes >= 10 stay 0
    logits = jnp.dot(h2.astype(w3_ref.dtype), w3_ref[...],
                     preferred_element_type=jnp.float32)
    o_ref[...] = (logits + b3_ref[...]).astype(o_ref.dtype)


def _batch_tiling(batch, block_b, min_steps):
    """Minimal-padding batch tiling: (grid steps g, tile tb (mult of 16), b_pad)."""
    g = max(pl.cdiv(batch, block_b), min(min_steps, pl.cdiv(batch, 16)))
    tb = ((pl.cdiv(batch, g) + 15) // 16) * 16   # 16: bf16 sublane packing
    return g, tb, g * tb


def mlp_forward(x_nchw, params, *, block_b=None):
    """Forward pass of the CIFAR-10 MLP. Returns (B, 10) bf16 logits."""
    w1, b1, w2, b2, w3, b3 = params
    B = x_nchw.shape[0]
    # Flatten exactly like torch's x.view(-1, 3*32*32) (row-major over C,H,W).
    x = x_nchw.reshape(B, IN_FEATURES)

    # ---- per-generation tile defaults --------------------------------------
    vmem_cap = 128 << 20
    try:  # trace-time HW query; fall back to v5e/v6e capacity if unavailable
        vmem_cap = int(getattr(pltpu.get_tpu_info(), "vmem_capacity_bytes",
                               vmem_cap))
    except Exception:
        pass
    small_vmem = vmem_cap <= (64 << 20)          # v7x: 64 MiB per TensorCore
    if block_b is None:
        block_b = 768 if small_vmem else 1024
    # v7x shards the "parallel" grid axis across 2 TensorCores: aim for >= 4
    # grid steps (>= 2 pipelined steps per core) whenever B is big enough.
    min_steps = 4 if small_vmem else 2

    g, tb, b_pad = _batch_tiling(B, block_b, min_steps)
    if b_pad != B:                               # only the few rows required
        x = jnp.pad(x, ((0, b_pad - B), (0, 0)))

    # ---- bf16 weights (lane-pad the narrow 64/10 feature dims), f32 biases --
    bf = jnp.bfloat16
    w1b = w1.astype(bf)                                                  # (3072, 128)
    w2b = jnp.zeros((H1, LANE), bf).at[:, :H2].set(w2.astype(bf))        # (128, 128)
    w3b = jnp.zeros((LANE, LANE), bf).at[:H2, :OUT].set(w3.astype(bf))   # (128, 128)
    b1f = b1.reshape(1, H1).astype(jnp.float32)
    b2f = jnp.zeros((1, LANE), jnp.float32).at[:, :H2].set(
        b2.reshape(1, H2).astype(jnp.float32))
    b3f = jnp.zeros((1, LANE), jnp.float32).at[:, :OUT].set(
        b3.reshape(1, OUT).astype(jnp.float32))

    # ---- VMEM budget: double-buffered x/out tiles, resident weights, plus the
    #      in-kernel temporaries (bf16 x cast, h1/h2/logits and their casts).
    xb = x.dtype.itemsize
    vmem_bytes = (2 * tb * IN_FEATURES * xb            # x tiles (caller dtype)
                  + tb * IN_FEATURES * 2               # in-kernel bf16 x cast
                  + 2 * tb * LANE * 2                  # out tiles (bf16)
                  + 2 * (w1b.size + w2b.size + w3b.size) * 2
                  + 2 * (b1f.size + b2f.size + b3f.size) * 4
                  + 3 * tb * LANE * 4                  # h1 / h2 / logits (f32)
                  + 2 * tb * LANE * 2)                 # bf16 casts of h1 / h2
    vmem_limit = int(min(int(vmem_bytes * 1.25) + (4 << 20),
                         (56 << 20) if small_vmem else (100 << 20)))

    flops = 2 * b_pad * (IN_FEATURES * H1 + H1 * LANE + LANE * LANE)
    bytes_accessed = (x.size * xb
                      + (w1b.size + w2b.size + w3b.size) * 2
                      + (b1f.size + b2f.size + b3f.size) * 4
                      + b_pad * LANE * 2)
    cost = pl.CostEstimate(flops=flops, transcendentals=0,
                           bytes_accessed=bytes_accessed)

    out_padded = pl.pallas_call(
        mlp_kernel,
        out_shape=jax.ShapeDtypeStruct((b_pad, LANE), jnp.bfloat16),
        grid=(g,),
        in_specs=[
            pl.BlockSpec((tb, IN_FEATURES), lambda i: (i, 0)),   # x: tiled over batch
            pl.BlockSpec((IN_FEATURES, H1), lambda i: (0, 0)),   # w1: resident
            pl.BlockSpec((1, H1), lambda i: (0, 0)),             # b1: resident
            pl.BlockSpec((H1, LANE), lambda i: (0, 0)),          # w2 (padded): resident
            pl.BlockSpec((1, LANE), lambda i: (0, 0)),           # b2 (padded): resident
            pl.BlockSpec((LANE, LANE), lambda i: (0, 0)),        # w3 (padded): resident
            pl.BlockSpec((1, LANE), lambda i: (0, 0)),           # b3 (padded): resident
        ],
        out_specs=pl.BlockSpec((tb, LANE), lambda i: (i, 0)),    # lane-dense bf16 slab
        compiler_params=pltpu.CompilerParams(
            dimension_semantics=("parallel",),
            vmem_limit_bytes=vmem_limit,
        ),
        cost_estimate=cost,
    )(x, w1b, b1f, w2b, b2f, w3b, b3f)

    # Drop batch padding and lane padding. Consumers that can take the padded
    # (b_pad, 128) bf16 slab should fuse/skip this slice instead.
    return out_padded[:B, :OUT]


def init_params(key):
    """Deterministic init mirroring torch.nn.Linear (uniform +-1/sqrt(fan_in)).

    Weights are stored transposed, i.e. (in_features, out_features), so the
    kernel computes x @ W + b (== torch's x @ W.T + b). Kept in f32; the
    wrapper casts to bf16 and lane-pads.
    """
    def linear(key, fan_in, fan_out):
        kw, kb = jax.random.split(key)
        bound = 1.0 / (fan_in ** 0.5)
        w = jax.random.uniform(kw, (fan_in, fan_out), jnp.float32, -bound, bound)
        b = jax.random.uniform(kb, (1, fan_out), jnp.float32, -bound, bound)
        return w, b

    k1, k2, k3 = jax.random.split(key, 3)
    w1, b1 = linear(k1, IN_FEATURES, H1)
    w2, b2 = linear(k2, H1, H2)
    w3, b3 = linear(k3, H2, OUT)
    return (w1, b1, w2, b2, w3, b3)


if __name__ == "__main__":
    key = jax.random.PRNGKey(0)
    k_params, k_x = jax.random.split(key)

    params = init_params(k_params)
    x = jax.random.normal(k_x, (2, 3, 32, 32), jnp.float32)  # NCHW, CIFAR-10 size

    out = mlp_forward(x, params)
    out = jax.block_until_ready(out)
    assert out.shape == (2, 10)
    out_f32 = out.astype(jnp.float32)

    # Reference mirroring the kernel's mixed precision (bf16 matmuls, f32 acc,
    # bf16 output rounding).
    w1, b1, w2, b2, w3, b3 = params
    bf = jnp.bfloat16
    xf = x.reshape(2, -1)
    r = jnp.maximum(jnp.dot(xf.astype(bf), w1.astype(bf),
                            preferred_element_type=jnp.float32) + b1, 0.0)
    r = jnp.maximum(jnp.dot(r.astype(bf), w2.astype(bf),
                            preferred_element_type=jnp.float32) + b2, 0.0)
    ref_mixed = (jnp.dot(r.astype(bf), w3.astype(bf),
                         preferred_element_type=jnp.float32) + b3)
    ref_mixed = ref_mixed.astype(bf).astype(jnp.float32)
    assert jnp.allclose(out_f32, ref_mixed, atol=1e-2, rtol=1e-2)

    # Loose semantic check against full-f32 math (same eval-mode dropout).
    ref_f32 = jnp.maximum(xf @ w1 + b1, 0.0)
    ref_f32 = jnp.maximum(ref_f32 @ w2 + b2, 0.0)
    ref_f32 = ref_f32 @ w3 + b3
    assert jnp.allclose(out_f32, ref_f32, atol=5e-2, rtol=5e-2)

    print("KERNEL_OK")
</pallas_src>

<mosaic_0001>
module attributes {stable_mosaic.version = 11 : i64} {
  func.func @mlp_kernel(%arg0: i32, %arg1: memref<16x3072xf32, #tpu.memory_space<vmem>>, %arg2: memref<3072x128xbf16, #tpu.memory_space<vmem>>, %arg3: memref<1x128xf32, #tpu.memory_space<vmem>>, %arg4: memref<128x128xbf16, #tpu.memory_space<vmem>>, %arg5: memref<1x128xf32, #tpu.memory_space<vmem>>, %arg6: memref<128x128xbf16, #tpu.memory_space<vmem>>, %arg7: memref<1x128xf32, #tpu.memory_space<vmem>>, %arg8: memref<16x128xbf16, #tpu.memory_space<vmem>>) attributes {dimension_semantics = [#tpu.dimension_semantics<parallel>], iteration_bounds = array<i64: 1>, scalar_prefetch = 0 : i64, scratch_operands = 0 : i64, tpu.core_type = #tpu.core_type<tc>, window_params = [{transform_indices = @transform_0, window_bounds = array<i64: 16, 3072>}, {pipeline_mode = #tpu.pipeline_mode<synchronous>, transform_indices = @transform_1, window_bounds = array<i64: 3072, 128>}, {pipeline_mode = #tpu.pipeline_mode<synchronous>, transform_indices = @transform_2, window_bounds = array<i64: 1, 128>}, {pipeline_mode = #tpu.pipeline_mode<synchronous>, transform_indices = @transform_3, window_bounds = array<i64: 128, 128>}, {pipeline_mode = #tpu.pipeline_mode<synchronous>, transform_indices = @transform_4, window_bounds = array<i64: 1, 128>}, {pipeline_mode = #tpu.pipeline_mode<synchronous>, transform_indices = @transform_5, window_bounds = array<i64: 128, 128>}, {pipeline_mode = #tpu.pipeline_mode<synchronous>, transform_indices = @transform_6, window_bounds = array<i64: 1, 128>}, {transform_indices = @transform_7, window_bounds = array<i64: 16, 128>}]} {
    %c0 = arith.constant 0 : index
    %c0_0 = arith.constant 0 : index
    %0 = vector.load %arg1[%c0, %c0_0] : memref<16x3072xf32, #tpu.memory_space<vmem>>, vector<16x3072xf32>
    %1 = arith.truncf %0 : vector<16x3072xf32> to vector<16x3072xbf16>
    %c0_1 = arith.constant 0 : index
    %c0_2 = arith.constant 0 : index
    %2 = vector.load %arg2[%c0_1, %c0_2] : memref<3072x128xbf16, #tpu.memory_space<vmem>>, vector<3072x128xbf16>
    %cst = arith.constant dense<0.000000e+00> : vector<16x128xf32>
    %3 = tpu.matmul %1, %2, %cst {dimension_numbers = #tpu.dot_dimension_numbers<[1], [0], [0], [1], [0, 0, 1, 1], [], []>} : vector<16x3072xbf16>, vector<3072x128xbf16>, vector<16x128xf32> -> vector<16x128xf32>
    %c0_3 = arith.constant 0 : index
    %c0_4 = arith.constant 0 : index
    %4 = vector.load %arg3[%c0_3, %c0_4] : memref<1x128xf32, #tpu.memory_space<vmem>>, vector<1x128xf32>
    %5 = vector.broadcast %4 : vector<1x128xf32> to vector<16x128xf32>
    %6 = arith.addf %3, %5 : vector<16x128xf32>
    %cst_5 = arith.constant 0.000000e+00 : f32
    %7 = vector.broadcast %cst_5 : f32 to vector<16x128xf32>
    %8 = arith.maximumf %6, %7 : vector<16x128xf32>
    %9 = arith.truncf %8 : vector<16x128xf32> to vector<16x128xbf16>
    %c0_6 = arith.constant 0 : index
    %c0_7 = arith.constant 0 : index
    %10 = vector.load %arg4[%c0_6, %c0_7] : memref<128x128xbf16, #tpu.memory_space<vmem>>, vector<128x128xbf16>
    %cst_8 = arith.constant dense<0.000000e+00> : vector<16x128xf32>
    %11 = tpu.matmul %9, %10, %cst_8 {dimension_numbers = #tpu.dot_dimension_numbers<[1], [0], [0], [1], [0, 0, 1, 1], [], []>} : vector<16x128xbf16>, vector<128x128xbf16>, vector<16x128xf32> -> vector<16x128xf32>
    %c0_9 = arith.constant 0 : index
    %c0_10 = arith.constant 0 : index
    %12 = vector.load %arg5[%c0_9, %c0_10] : memref<1x128xf32, #tpu.memory_space<vmem>>, vector<1x128xf32>
    %13 = vector.broadcast %12 : vector<1x128xf32> to vector<16x128xf32>
    %14 = arith.addf %11, %13 : vector<16x128xf32>
    %cst_11 = arith.constant 0.000000e+00 : f32
    %15 = vector.broadcast %cst_11 : f32 to vector<16x128xf32>
    %16 = arith.maximumf %14, %15 : vector<16x128xf32>
    %17 = arith.truncf %16 : vector<16x128xf32> to vector<16x128xbf16>
    %c0_12 = arith.constant 0 : index
    %c0_13 = arith.constant 0 : index
    %18 = vector.load %arg6[%c0_12, %c0_13] : memref<128x128xbf16, #tpu.memory_space<vmem>>, vector<128x128xbf16>
    %cst_14 = arith.constant dense<0.000000e+00> : vector<16x128xf32>
    %19 = tpu.matmul %17, %18, %cst_14 {dimension_numbers = #tpu.dot_dimension_numbers<[1], [0], [0], [1], [0, 0, 1, 1], [], []>} : vector<16x128xbf16>, vector<128x128xbf16>, vector<16x128xf32> -> vector<16x128xf32>
    %c0_15 = arith.constant 0 : index
    %c0_16 = arith.constant 0 : index
    %20 = vector.load %arg7[%c0_15, %c0_16] : memref<1x128xf32, #tpu.memory_space<vmem>>, vector<1x128xf32>
    %21 = vector.broadcast %20 : vector<1x128xf32> to vector<16x128xf32>
    %22 = arith.addf %19, %21 : vector<16x128xf32>
    %23 = arith.truncf %22 : vector<16x128xf32> to vector<16x128xbf16>
    %c0_17 = arith.constant 0 : index
    %c0_18 = arith.constant 0 : index
    %24 = vector.load %arg8[%c0_17, %c0_18] : memref<16x128xbf16, #tpu.memory_space<vmem>>, vector<16x128xbf16>
    tpu.vector_store %arg8[%c0_17, %c0_18], %23 {strides = array<i32>} : memref<16x128xbf16, #tpu.memory_space<vmem>>, vector<16x128xbf16>,
    return
  }
  func.func @transform_0(%arg0: i32) -> (i32, i32) {
    %c0_i32 = arith.constant 0 : i32
    %c0_i32_0 = arith.constant 0 : i32
    return %arg0, %c0_i32 : i32, i32
  }
  func.func @transform_1(%arg0: i32) -> (i32, i32) {
    %c0_i32 = arith.constant 0 : i32
    %c0_i32_0 = arith.constant 0 : i32
    %c0_i32_1 = arith.constant 0 : i32
    return %c0_i32, %c0_i32_0 : i32, i32
  }
  func.func @transform_2(%arg0: i32) -> (i32, i32) {
    %c0_i32 = arith.constant 0 : i32
    %c0_i32_0 = arith.constant 0 : i32
    %c0_i32_1 = arith.constant 0 : i32
    return %c0_i32, %c0_i32_0 : i32, i32
  }
  func.func @transform_3(%arg0: i32) -> (i32, i32) {
    %c0_i32 = arith.constant 0 : i32
    %c0_i32_0 = arith.constant 0 : i32
    %c0_i32_1 = arith.constant 0 : i32
    return %c0_i32, %c0_i32_0 : i32, i32
  }
  func.func @transform_4(%arg0: i32) -> (i32, i32) {
    %c0_i32 = arith.constant 0 : i32
    %c0_i32_0 = arith.constant 0 : i32
    %c0_i32_1 = arith.constant 0 : i32
    return %c0_i32, %c0_i32_0 : i32, i32
  }
  func.func @transform_5(%arg0: i32) -> (i32, i32) {
    %c0_i32 = arith.constant 0 : i32
    %c0_i32_0 = arith.constant 0 : i32
    %c0_i32_1 = arith.constant 0 : i32
    return %c0_i32, %c0_i32_0 : i32, i32
  }
  func.func @transform_6(%arg0: i32) -> (i32, i32) {
    %c0_i32 = arith.constant 0 : i32
    %c0_i32_0 = arith.constant 0 : i32
    %c0_i32_1 = arith.constant 0 : i32
    return %c0_i32, %c0_i32_0 : i32, i32
  }
  func.func @transform_7(%arg0: i32) -> (i32, i32) {
    %c0_i32 = arith.constant 0 : i32
    %c0_i32_0 = arith.constant 0 : i32
    return %arg0, %c0_i32 : i32, i32
  }
}

</mosaic_0001>

<llo_original>
// kernel: tpu_custom_call.1
$region0: #{tpu_custom_call.1}
  #allocation0 [shape = 'u32[]', space=smem, size = 0x4, offset = 0x4, fixed_abs, tag = 'smem constant byte address 0x4 - core index']
  #allocation1 [shape = 'u32[144,128]{1,0:T(1,128)}', space=vmem, size = 0x12000, scoped, tag = 'internal scratch']
  %s0 = inlined_call_operand.hbm [shape: f32[16,3072], index: 0, kind: input, shape index: {}]
  %s1 = inlined_call_operand.hbm [shape: bf16[3072,128], index: 1, kind: input, shape index: {}]
  %s2 = inlined_call_operand.vmem [shape: f32[1,128], index: 2, kind: input, shape index: {}]
  %s3 = inlined_call_operand.hbm [shape: bf16[128,128], index: 3, kind: input, shape index: {}]
  %s4 = inlined_call_operand.vmem [shape: f32[1,128], index: 4, kind: input, shape index: {}]
  %s5 = inlined_call_operand.hbm [shape: bf16[128,128], index: 5, kind: input, shape index: {}]
  %s6 = inlined_call_operand.vmem [shape: f32[1,128], index: 6, kind: input, shape index: {}]
  %s7 = inlined_call_operand.hbm [shape: bf16[16,128], index: 7, kind: output, shape index: {}]
  %s8 = sld [smem:[#allocation0]]
  $region54: #{tpu_custom_call.1} parent=0
    _
  %s10 = ssub.s32 1, %s8
  %s11 = scalar_select 0, %s10, %s8
  $region1: #{tpu_custom_call.1} parent=0
    #allocation2 [shape = 'u8[196608]{0}', space=vmem, size = 0x30000, scoped, tag = 'input window, operand 0, single buffered']
    #allocation3 [shape = 's32[1]{0}', space=sflag, size = 0x4, scoped, tag = 'scoped memory for tpu_custom_call.1']
    #allocation4 [shape = 's32[1]{0}', space=sflag, size = 0x4, scoped, tag = 'scoped memory for tpu_custom_call.1']
    #allocation5 [shape = 'u8[786432]{0}', space=vmem, size = 0xc0000, scoped, tag = 'input window, operand 1, single buffered']
    #allocation6 [shape = 's32[1]{0}', space=sflag, size = 0x4, scoped, tag = 'scoped memory for tpu_custom_call.1']
    #allocation7 [shape = 'u8[32768]{0}', space=vmem, size = 0x8000, scoped, tag = 'input window, operand 3, single buffered']
    #allocation8 [shape = 'u8[32768]{0}', space=vmem, size = 0x8000, scoped, tag = 'input window, operand 5, single buffered']
    #allocation9 [shape = 's32[1]{0}', space=sflag, size = 0x4, scoped, tag = 'scoped memory for tpu_custom_call.1']
    #allocation10 [shape = 'u8[4096]{0}', space=vmem, size = 0x1000, scoped, tag = 'output window, operand 0, single buffered']
    %12 = vsyncpa [#allocation3], 0
    %13 = vsyncpa [#allocation6], 0
    %14 = vsyncpa [#allocation9], 0
    %15 = vsyncpa [#allocation4], 0
    // Predicated region
    $region2: #{tpu_custom_call.1} parent=1 // pred_check
      _
    $region3: #{tpu_custom_call.1} parent=1 // pred_check_branch
      %17 = sbr.rel (0) target = $region5
    $region4: #{tpu_custom_call.1} parent=1 // pred_region
      %s19 = ssub.s32 6144, 6144
      %20 = vsyncadd [#allocation3], %s19
      %s21 = sshll.u32 [#allocation2], 4
      %s22 = int_to_ptr.vmem [resolvable:$true] %s21
      %27 = dma.hbm_to_vmem [thread:$0]  %s0, 6144, %s22, [#allocation3], 3072, 3072, 192
    $region5: #{tpu_custom_call.1} parent=1 // pred_fallthru
      _
    // Predicated region
    $region6: #{tpu_custom_call.1} parent=1 // pred_check
      _
    $region7: #{tpu_custom_call.1} parent=1 // pred_check_branch
      %29 = sbr.rel (0) target = $region9
    $region8: #{tpu_custom_call.1} parent=1 // pred_region
      %s31 = ssub.s32 24576, 24576
      %32 = vsyncadd [#allocation6], %s31
      %s33 = sshll.u32 [#allocation5], 4
      %s34 = int_to_ptr.vmem [resolvable:$true] %s33
      %39 = dma.hbm_to_vmem [thread:$0]  %s1, 24576, %s34, [#allocation6], 64, 64, 4
    $region9: #{tpu_custom_call.1} parent=1 // pred_fallthru
      _
    // Predicated region
    $region10: #{tpu_custom_call.1} parent=1 // pred_check
      _
    $region11: #{tpu_custom_call.1} parent=1 // pred_check_branch
      %41 = sbr.rel (0) target = $region13
    $region12: #{tpu_custom_call.1} parent=1 // pred_region
      _
    $region13: #{tpu_custom_call.1} parent=1 // pred_fallthru
      _
    // Predicated region
    $region14: #{tpu_custom_call.1} parent=1 // pred_check
      _
    $region15: #{tpu_custom_call.1} parent=1 // pred_check_branch
      %43 = sbr.rel (0) target = $region17
    $region16: #{tpu_custom_call.1} parent=1 // pred_region
      %s45 = ssub.s32 1024, 1024
      %46 = vsyncadd [#allocation6], %s45
      %s47 = sshll.u32 [#allocation7], 4
      %s48 = int_to_ptr.vmem [resolvable:$true] %s47
      %53 = dma.hbm_to_vmem [thread:$0]  %s3, 1024, %s48, [#allocation6], 64, 64, 4
    $region17: #{tpu_custom_call.1} parent=1 // pred_fallthru
      _
    // Predicated region
    $region18: #{tpu_custom_call.1} parent=1 // pred_check
      _
    $region19: #{tpu_custom_call.1} parent=1 // pred_check_branch
      %55 = sbr.rel (0) target = $region21
    $region20: #{tpu_custom_call.1} parent=1 // pred_region
      _
    $region21: #{tpu_custom_call.1} parent=1 // pred_fallthru
      _
    // Predicated region
    $region22: #{tpu_custom_call.1} parent=1 // pred_check
      _
    $region23: #{tpu_custom_call.1} parent=1 // pred_check_branch
      %57 = sbr.rel (0) target = $region25
    $region24: #{tpu_custom_call.1} parent=1 // pred_region
      %s59 = ssub.s32 1024, 1024
      %60 = vsyncadd [#allocation9], %s59
      %s61 = sshll.u32 [#allocation8], 4
      %s62 = int_to_ptr.vmem [resolvable:$true] %s61
      %67 = dma.hbm_to_vmem [thread:$0]  %s5, 1024, %s62, [#allocation9], 64, 64, 4
    $region25: #{tpu_custom_call.1} parent=1 // pred_fallthru
      _
    // Predicated region
    $region26: #{tpu_custom_call.1} parent=1 // pred_check
      _
    $region27: #{tpu_custom_call.1} parent=1 // pred_check_branch
      %69 = sbr.rel (0) target = $region29
    $region28: #{tpu_custom_call.1} parent=1 // pred_region
      _
    $region29: #{tpu_custom_call.1} parent=1 // pred_fallthru
      _
    // Predicated region
    $region30: #{tpu_custom_call.1} parent=1 // pred_check
      _
    $region31: #{tpu_custom_call.1} parent=1 // pred_check_branch
      %71 = sbr.rel (0) target = $region33
    $region32: #{tpu_custom_call.1} parent=1 // pred_region
      %72 = dma.done [#allocation3], 6144
    $region33: #{tpu_custom_call.1} parent=1 // pred_fallthru
      _
    // Predicated region
    $region34: #{tpu_custom_call.1} parent=1 // pred_check
      _
    $region35: #{tpu_custom_call.1} parent=1 // pred_check_branch
      %74 = sbr.rel (0) target = $region37
    $region36: #{tpu_custom_call.1} parent=1 // pred_region
      %75 = dma.done [#allocation6], 24576
    $region37: #{tpu_custom_call.1} parent=1 // pred_fallthru
      _
    // Predicated region
    $region38: #{tpu_custom_call.1} parent=1 // pred_check
      _
    $region39: #{tpu_custom_call.1} parent=1 // pred_check_branch
      %77 = sbr.rel (0) target = $region41
    $region40: #{tpu_custom_call.1} parent=1 // pred_region
      %78 = dma.done [#allocation6], 1024
    $region41: #{tpu_custom_call.1} parent=1 // pred_fallthru
      _
    // Predicated region
    $region42: #{tpu_custom_call.1} parent=1 // pred_check
      _
    $region43: #{tpu_custom_call.1} parent=1 // pred_check_branch
      %80 = sbr.rel (0) target = $region45
    $region44: #{tpu_custom_call.1} parent=1 // pred_region
      %81 = dma.done [#allocation9], 1024
    $region45: #{tpu_custom_call.1} parent=1 // pred_fallthru
      _
    %v83 = vld [vmem:[#allocation2] sm:$0xff]
    %v84 = vld [vmem:[#allocation2 + $0x8] sm:$0xff]
    %v85 = vld [vmem:[#allocation2 + $0x10] sm:$0xff]
    %v86 = vld [vmem:[#allocation2 + $0x18] sm:$0xff]
    %v87 = vld [vmem:[#allocation2 + $0x20] sm:$0xff]
    %v88 = vld [vmem:[#allocation2 + $0x28] sm:$0xff]
    %v89 = vld [vmem:[#allocation2 + $0x30] sm:$0xff]
    %v90 = vld [vmem:[#allocation2 + $0x38] sm:$0xff]
    %v91 = vld [vmem:[#allocation2 + $0x40] sm:$0xff]
    %v92 = vld [vmem:[#allocation2 + $0x48] sm:$0xff]
    %v93 = vld [vmem:[#allocation2 + $0x50] sm:$0xff]
    %v94 = vld [vmem:[#allocation2 + $0x58] sm:$0xff]
    %v95 = vld [vmem:[#allocation2 + $0x60] sm:$0xff]
    %v96 = vld [vmem:[#allocation2 + $0x68] sm:$0xff]
    %v97 = vld [vmem:[#allocation2 + $0x70] sm:$0xff]
    %v98 = vld [vmem:[#allocation2 + $0x78] sm:$0xff]
    %v99 = vld [vmem:[#allocation2 + $0x80] sm:$0xff]
    %v100 = vld [vmem:[#allocation2 + $0x88] sm:$0xff]
    %v101 = vld [vmem:[#allocation2 + $0x90] sm:$0xff]
    %v102 = vld [vmem:[#allocation2 + $0x98] sm:$0xff]
    %v103 = vld [vmem:[#allocation2 + $0xa0] sm:$0xff]
    %v104 = vld [vmem:[#allocation2 + $0xa8] sm:$0xff]
    %v105 = vld [vmem:[#allocation2 + $0xb0] sm:$0xff]
    %v106 = vld [vmem:[#allocation2 + $0xb8] sm:$0xff]
    %v107 = vld [vmem:[#allocation2 + $0xc0] sm:$0xff]
    %v108 = vld [vmem:[#allocation2 + $0xc8] sm:$0xff]
    %v109 = vld [vmem:[#allocation2 + $0xd0] sm:$0xff]
    %v110 = vld [vmem:[#allocation2 + $0xd8] sm:$0xff]
    %v111 = vld [vmem:[#allocation2 + $0xe0] sm:$0xff]
    %v112 = vld [vmem:[#allocation2 + $0xe8] sm:$0xff]
    %v113 = vld [vmem:[#allocation2 + $0xf0] sm:$0xff]
    %v114 = vld [vmem:[#allocation2 + $0xf8] sm:$0xff]
    %v115 = vld [vmem:[#allocation2 + $0x100] sm:$0xff]
    %v116 = vld [vmem:[#allocation2 + $0x108] sm:$0xff]
    %v117 = vld [vmem:[#allocation2 + $0x110] sm:$0xff]
    %v118 = vld [vmem:[#allocation2 + $0x118] sm:$0xff]
    %v119 = vld [vmem:[#allocation2 + $0x120] sm:$0xff]
    %v120 = vld [vmem:[#allocation2 + $0x128] sm:$0xff]
    %v121 = vld [vmem:[#allocation2 + $0x130] sm:$0xff]
    %v122 = vld [vmem:[#allocation2 + $0x138] sm:$0xff]
    %v123 = vld [vmem:[#allocation2 + $0x140] sm:$0xff]
    %v124 = vld [vmem:[#allocation2 + $0x148] sm:$0xff]
    %v125 = vld [vmem:[#allocation2 + $0x150] sm:$0xff]
    %v126 = vld [vmem:[#allocation2 + $0x158] sm:$0xff]
    %v127 = vld [vmem:[#allocation2 + $0x160] sm:$0xff]
    %v128 = vld [vmem:[#allocation2 + $0x168] sm:$0xff]
    %v129 = vld [vmem:[#allocation2 + $0x170] sm:$0xff]
    %v130 = vld [vmem:[#allocation2 + $0x178] sm:$0xff]
    %v131 = vpack.c.bf16 %v107, %v83
    %v132 = vpack.c.bf16 %v108, %v84
    %v133 = vpack.c.bf16 %v109, %v85
    %v134 = vpack.c.bf16 %v110, %v86
    %v135 = vpack.c.bf16 %v111, %v87
    %v136 = vpack.c.bf16 %v112, %v88
    %v137 = vpack.c.bf16 %v113, %v89
    %v138 = vpack.c.bf16 %v114, %v90
    %v139 = vpack.c.bf16 %v115, %v91
    %v140 = vpack.c.bf16 %v116, %v92
    %v141 = vpack.c.bf16 %v117, %v93
    %v142 = vpack.c.bf16 %v118, %v94
    %v143 = vpack.c.bf16 %v119, %v95
    %v144 = vpack.c.bf16 %v120, %v96
    %v145 = vpack.c.bf16 %v121, %v97
    %v146 = vpack.c.bf16 %v122, %v98
    %v147 = vpack.c.bf16 %v123, %v99
    %v148 = vpack.c.bf16 %v124, %v100
    %v149 = vpack.c.bf16 %v125, %v101
    %v150 = vpack.c.bf16 %v126, %v102
    %v151 = vpack.c.bf16 %v127, %v103
    %v152 = vpack.c.bf16 %v128, %v104
    %v153 = vpack.c.bf16 %v129, %v105
    %v154 = vpack.c.bf16 %v130, %v106
    %v155 = vld [vmem:[#allocation5] sm:$0xf]
    %v156 = vld [vmem:[#allocation5 + $0x4] sm:$0xf]
    %v157 = vld [vmem:[#allocation5 + $0x8] sm:$0xf]
    %v158 = vld [vmem:[#allocation5 + $0xc] sm:$0xf]
    %v159 = vld [vmem:[#allocation5 + $0x10] sm:$0xf]
    %v160 = vld [vmem:[#allocation5 + $0x14] sm:$0xf]
    %v161 = vld [vmem:[#allocation5 + $0x18] sm:$0xf]
    %v162 = vld [vmem:[#allocation5 + $0x1c] sm:$0xf]
    %v163 = vld [vmem:[#allocation5 + $0x20] sm:$0xf]
    %v164 = vld [vmem:[#allocation5 + $0x24] sm:$0xf]
    %v165 = vld [vmem:[#allocation5 + $0x28] sm:$0xf]
    %v166 = vld [vmem:[#allocation5 + $0x2c] sm:$0xf]
    %v167 = vld [vmem:[#allocation5 + $0x30] sm:$0xf]
    %v168 = vld [vmem:[#allocation5 + $0x34] sm:$0xf]
    %v169 = vld [vmem:[#allocation5 + $0x38] sm:$0xf]
    %v170 = vld [vmem:[#allocation5 + $0x3c] sm:$0xf]
    %v171 = vld [vmem:[#allocation5 + $0x40] sm:$0xf]
    %v172 = vld [vmem:[#allocation5 + $0x44] sm:$0xf]
    %v173 = vld [vmem:[#allocation5 + $0x48] sm:$0xf]
    %v174 = vld [vmem:[#allocation5 + $0x4c] sm:$0xf]
    %v175 = vld [vmem:[#allocation5 + $0x50] sm:$0xf]
    %v176 = vld [vmem:[#allocation5 + $0x54] sm:$0xf]
    %v177 = vld [vmem:[#allocation5 + $0x58] sm:$0xf]
    %v178 = vld [vmem:[#allocation5 + $0x5c] sm:$0xf]
    %v179 = vld [vmem:[#allocation5 + $0x60] sm:$0xf]
    %v180 = vld [vmem:[#allocation5 + $0x64] sm:$0xf]
    %v181 = vld [vmem:[#allocation5 + $0x68] sm:$0xf]
    %v182 = vld [vmem:[#allocation5 + $0x6c] sm:$0xf]
    %v183 = vld [vmem:[#allocation5 + $0x70] sm:$0xf]
    %v184 = vld [vmem:[#allocation5 + $0x74] sm:$0xf]
    %v185 = vld [vmem:[#allocation5 + $0x78] sm:$0xf]
    %v186 = vld [vmem:[#allocation5 + $0x7c] sm:$0xf]
    %v187 = vld [vmem:[#allocation5 + $0x80] sm:$0xf]
    %v188 = vld [vmem:[#allocation5 + $0x84] sm:$0xf]
    %v189 = vld [vmem:[#allocation5 + $0x88] sm:$0xf]
    %v190 = vld [vmem:[#allocation5 + $0x8c] sm:$0xf]
    %v191 = vld [vmem:[#allocation5 + $0x90] sm:$0xf]
    %v192 = vld [vmem:[#allocation5 + $0x94] sm:$0xf]
    %v193 = vld [vmem:[#allocation5 + $0x98] sm:$0xf]
    %v194 = vld [vmem:[#allocation5 + $0x9c] sm:$0xf]
    %v195 = vld [vmem:[#allocation5 + $0xa0] sm:$0xf]
    %v196 = vld [vmem:[#allocation5 + $0xa4] sm:$0xf]
    %v197 = vld [vmem:[#allocation5 + $0xa8] sm:$0xf]
    %v198 = vld [vmem:[#allocation5 + $0xac] sm:$0xf]
    %v199 = vld [vmem:[#allocation5 + $0xb0] sm:$0xf]
    %v200 = vld [vmem:[#allocation5 + $0xb4] sm:$0xf]
    %v201 = vld [vmem:[#allocation5 + $0xb8] sm:$0xf]
    %v202 = vld [vmem:[#allocation5 + $0xbc] sm:$0xf]
    %v203 = vld [vmem:[#allocation5 + $0xc0] sm:$0xf]
    %v204 = vld [vmem:[#allocation5 + $0xc4] sm:$0xf]
    %v205 = vld [vmem:[#allocation5 + $0xc8] sm:$0xf]
    %v206 = vld [vmem:[#allocation5 + $0xcc] sm:$0xf]
    %v207 = vld [vmem:[#allocation5 + $0xd0] sm:$0xf]
    %v208 = vld [vmem:[#allocation5 + $0xd4] sm:$0xf]
    %v209 = vld [vmem:[#allocation5 + $0xd8] sm:$0xf]
    %v210 = vld [vmem:[#allocation5 + $0xdc] sm:$0xf]
    %v211 = vld [vmem:[#allocation5 + $0xe0] sm:$0xf]
    %v212 = vld [vmem:[#allocation5 + $0xe4] sm:$0xf]
    %v213 = vld [vmem:[#allocation5 + $0xe8] sm:$0xf]
    %v214 = vld [vmem:[#allocation5 + $0xec] sm:$0xf]
    %v215 = vld [vmem:[#allocation5 + $0xf0] sm:$0xf]
    %v216 = vld [vmem:[#allocation5 + $0xf4] sm:$0xf]
    %v217 = vld [vmem:[#allocation5 + $0xf8] sm:$0xf]
    %v218 = vld [vmem:[#allocation5 + $0xfc] sm:$0xf]
    %v219 = vld [vmem:[#allocation5 + $0x100] sm:$0xf]
    %v220 = vld [vmem:[#allocation5 + $0x104] sm:$0xf]
    %v221 = vld [vmem:[#allocation5 + $0x108] sm:$0xf]
    %v222 = vld [vmem:[#allocation5 + $0x10c] sm:$0xf]
    %v223 = vld [vmem:[#allocation5 + $0x110] sm:$0xf]
    %v224 = vld [vmem:[#allocation5 + $0x114] sm:$0xf]
    %v225 = vld [vmem:[#allocation5 + $0x118] sm:$0xf]
    %v226 = vld [vmem:[#allocation5 + $0x11c] sm:$0xf]
    %v227 = vld [vmem:[#allocation5 + $0x120] sm:$0xf]
    %v228 = vld [vmem:[#allocation5 + $0x124] sm:$0xf]
    %v229 = vld [vmem:[#allocation5 + $0x128] sm:$0xf]
    %v230 = vld [vmem:[#allocation5 + $0x12c] sm:$0xf]
    %v231 = vld [vmem:[#allocation5 + $0x130] sm:$0xf]
    %v232 = vld [vmem:[#allocation5 + $0x134] sm:$0xf]
    %v233 = vld [vmem:[#allocation5 + $0x138] sm:$0xf]
    %v234 = vld [vmem:[#allocation5 + $0x13c] sm:$0xf]
    %v235 = vld [vmem:[#allocation5 + $0x140] sm:$0xf]
    %v236 = vld [vmem:[#allocation5 + $0x144] sm:$0xf]
    %v237 = vld [vmem:[#allocation5 + $0x148] sm:$0xf]
    %v238 = vld [vmem:[#allocation5 + $0x14c] sm:$0xf]
    %v239 = vld [vmem:[#allocation5 + $0x150] sm:$0xf]
    %v240 = vld [vmem:[#allocation5 + $0x154] sm:$0xf]
    %v241 = vld [vmem:[#allocation5 + $0x158] sm:$0xf]
    %v242 = vld [vmem:[#allocation5 + $0x15c] sm:$0xf]
    %v243 = vld [vmem:[#allocation5 + $0x160] sm:$0xf]
    %v244 = vld [vmem:[#allocation5 + $0x164] sm:$0xf]
    %v245 = vld [vmem:[#allocation5 + $0x168] sm:$0xf]
    %v246 = vld [vmem:[#allocation5 + $0x16c] sm:$0xf]
    %v247 = vld [vmem:[#allocation5 + $0x170] sm:$0xf]
    %v248 = vld [vmem:[#allocation5 + $0x174] sm:$0xf]
    %v249 = vld [vmem:[#allocation5 + $0x178] sm:$0xf]
    %v250 = vld [vmem:[#allocation5 + $0x17c] sm:$0xf]
    %v251 = vld [vmem:[#allocation5 + $0x180] sm:$0xf]
    %v252 = vld [vmem:[#allocation5 + $0x184] sm:$0xf]
    %v253 = vld [vmem:[#allocation5 + $0x188] sm:$0xf]
    %v254 = vld [vmem:[#allocation5 + $0x18c] sm:$0xf]
    %v255 = vld [vmem:[#allocation5 + $0x190] sm:$0xf]
    %v256 = vld [vmem:[#allocation5 + $0x194] sm:$0xf]
    %v257 = vld [vmem:[#allocation5 + $0x198] sm:$0xf]
    %v258 = vld [vmem:[#allocation5 + $0x19c] sm:$0xf]
    %v259 = vld [vmem:[#allocation5 + $0x1a0] sm:$0xf]
    %v260 = vld [vmem:[#allocation5 + $0x1a4] sm:$0xf]
    %v261 = vld [vmem:[#allocation5 + $0x1a8] sm:$0xf]
    %v262 = vld [vmem:[#allocation5 + $0x1ac] sm:$0xf]
    %v263 = vld [vmem:[#allocation5 + $0x1b0] sm:$0xf]
    %v264 = vld [vmem:[#allocation5 + $0x1b4] sm:$0xf]
    %v265 = vld [vmem:[#allocation5 + $0x1b8] sm:$0xf]
    %v266 = vld [vmem:[#allocation5 + $0x1bc] sm:$0xf]
    %v267 = vld [vmem:[#allocation5 + $0x1c0] sm:$0xf]
    %v268 = vld [vmem:[#allocation5 + $0x1c4] sm:$0xf]
    %v269 = vld [vmem:[#allocation5 + $0x1c8] sm:$0xf]
    %v270 = vld [vmem:[#allocation5 + $0x1cc] sm:$0xf]
    %v271 = vld [vmem:[#allocation5 + $0x1d0] sm:$0xf]
    %v272 = vld [vmem:[#allocation5 + $0x1d4] sm:$0xf]
    %v273 = vld [vmem:[#allocation5 + $0x1d8] sm:$0xf]
    %v274 = vld [vmem:[#allocation5 + $0x1dc] sm:$0xf]
    %v275 = vld [vmem:[#allocation5 + $0x1e0] sm:$0xf]
    %v276 = vld [vmem:[#allocation5 + $0x1e4] sm:$0xf]
    %v277 = vld [vmem:[#allocation5 + $0x1e8] sm:$0xf]
    %v278 = vld [vmem:[#allocation5 + $0x1ec] sm:$0xf]
    %v279 = vld [vmem:[#allocation5 + $0x1f0] sm:$0xf]
    %v280 = vld [vmem:[#allocation5 + $0x1f4] sm:$0xf]
    %v281 = vld [vmem:[#allocation5 + $0x1f8] sm:$0xf]
    %v282 = vld [vmem:[#allocation5 + $0x1fc] sm:$0xf]
    %v283 = vld [vmem:[#allocation5 + $0x200] sm:$0xf]
    %v284 = vld [vmem:[#allocation5 + $0x204] sm:$0xf]
    %v285 = vld [vmem:[#allocation5 + $0x208] sm:$0xf]
    %v286 = vld [vmem:[#allocation5 + $0x20c] sm:$0xf]
    %v287 = vld [vmem:[#allocation5 + $0x210] sm:$0xf]
    %v288 = vld [vmem:[#allocation5 + $0x214] sm:$0xf]
    %v289 = vld [vmem:[#allocation5 + $0x218] sm:$0xf]
    %v290 = vld [vmem:[#allocation5 + $0x21c] sm:$0xf]
    %v291 = vld [vmem:[#allocation5 + $0x220] sm:$0xf]
    %v292 = vld [vmem:[#allocation5 + $0x224] sm:$0xf]
    %v293 = vld [vmem:[#allocation5 + $0x228] sm:$0xf]
    %v294 = vld [vmem:[#allocation5 + $0x22c] sm:$0xf]
    %v295 = vld [vmem:[#allocation5 + $0x230] sm:$0xf]
    %v296 = vld [vmem:[#allocation5 + $0x234] sm:$0xf]
    %v297 = vld [vmem:[#allocation5 + $0x238] sm:$0xf]
    %v298 = vld [vmem:[#allocation5 + $0x23c] sm:$0xf]
    %v299 = vld [vmem:[#allocation5 + $0x240] sm:$0xf]
    %v300 = vld [vmem:[#allocation5 + $0x244] sm:$0xf]
    %v301 = vld [vmem:[#allocation5 + $0x248] sm:$0xf]
    %v302 = vld [vmem:[#allocation5 + $0x24c] sm:$0xf]
    %v303 = vld [vmem:[#allocation5 + $0x250] sm:$0xf]
    %v304 = vld [vmem:[#allocation5 + $0x254] sm:$0xf]
    %v305 = vld [vmem:[#allocation5 + $0x258] sm:$0xf]
    %v306 = vld [vmem:[#allocation5 + $0x25c] sm:$0xf]
    %v307 = vld [vmem:[#allocation5 + $0x260] sm:$0xf]
    %v308 = vld [vmem:[#allocation5 + $0x264] sm:$0xf]
    %v309 = vld [vmem:[#allocation5 + $0x268] sm:$0xf]
    %v310 = vld [vmem:[#allocation5 + $0x26c] sm:$0xf]
    %v311 = vld [vmem:[#allocation5 + $0x270] sm:$0xf]
    %v312 = vld [vmem:[#allocation5 + $0x274] sm:$0xf]
    %v313 = vld [vmem:[#allocation5 + $0x278] sm:$0xf]
    %v314 = vld [vmem:[#allocation5 + $0x27c] sm:$0xf]
    %v315 = vld [vmem:[#allocation5 + $0x280] sm:$0xf]
    %v316 = vld [vmem:[#allocation5 + $0x284] sm:$0xf]
    %v317 = vld [vmem:[#allocation5 + $0x288] sm:$0xf]
    %v318 = vld [vmem:[#allocation5 + $0x28c] sm:$0xf]
    %v319 = vld [vmem:[#allocation5 + $0x290] sm:$0xf]
    %v320 = vld [vmem:[#allocation5 + $0x294] sm:$0xf]
    %v321 = vld [vmem:[#allocation5 + $0x298] sm:$0xf]
    %v322 = vld [vmem:[#allocation5 + $0x29c] sm:$0xf]
    %v323 = vld [vmem:[#allocation5 + $0x2a0] sm:$0xf]
    %v324 = vld [vmem:[#allocation5 + $0x2a4] sm:$0xf]
    %v325 = vld [vmem:[#allocation5 + $0x2a8] sm:$0xf]
    %v326 = vld [vmem:[#allocation5 + $0x2ac] sm:$0xf]
    %v327 = vld [vmem:[#allocation5 + $0x2b0] sm:$0xf]
    %v328 = vld [vmem:[#allocation5 + $0x2b4] sm:$0xf]
    %v329 = vld [vmem:[#allocation5 + $0x2b8] sm:$0xf]
    %v330 = vld [vmem:[#allocation5 + $0x2bc] sm:$0xf]
    %v331 = vld [vmem:[#allocation5 + $0x2c0] sm:$0xf]
    %v332 = vld [vmem:[#allocation5 + $0x2c4] sm:$0xf]
    %v333 = vld [vmem:[#allocation5 + $0x2c8] sm:$0xf]
    %v334 = vld [vmem:[#allocation5 + $0x2cc] sm:$0xf]
    %v335 = vld [vmem:[#allocation5 + $0x2d0] sm:$0xf]
    %v336 = vld [vmem:[#allocation5 + $0x2d4] sm:$0xf]
    %v337 = vld [vmem:[#allocation5 + $0x2d8] sm:$0xf]
    %v338 = vld [vmem:[#allocation5 + $0x2dc] sm:$0xf]
    %v339 = vld [vmem:[#allocation5 + $0x2e0] sm:$0xf]
    %v340 = vld [vmem:[#allocation5 + $0x2e4] sm:$0xf]
    %v341 = vld [vmem:[#allocation5 + $0x2e8] sm:$0xf]
    %v342 = vld [vmem:[#allocation5 + $0x2ec] sm:$0xf]
    %v343 = vld [vmem:[#allocation5 + $0x2f0] sm:$0xf]
    %v344 = vld [vmem:[#allocation5 + $0x2f4] sm:$0xf]
    %v345 = vld [vmem:[#allocation5 + $0x2f8] sm:$0xf]
    %v346 = vld [vmem:[#allocation5 + $0x2fc] sm:$0xf]
    %v347 = vld [vmem:[#allocation5 + $0x300] sm:$0xf]
    %v348 = vld [vmem:[#allocation5 + $0x304] sm:$0xf]
    %v349 = vld [vmem:[#allocation5 + $0x308] sm:$0xf]
    %v350 = vld [vmem:[#allocation5 + $0x30c] sm:$0xf]
    %v351 = vld [vmem:[#allocation5 + $0x310] sm:$0xf]
    %v352 = vld [vmem:[#allocation5 + $0x314] sm:$0xf]
    %v353 = vld [vmem:[#allocation5 + $0x318] sm:$0xf]
    %v354 = vld [vmem:[#allocation5 + $0x31c] sm:$0xf]
    %v355 = vld [vmem:[#allocation5 + $0x320] sm:$0xf]
    %v356 = vld [vmem:[#allocation5 + $0x324] sm:$0xf]
    %v357 = vld [vmem:[#allocation5 + $0x328] sm:$0xf]
    %v358 = vld [vmem:[#allocation5 + $0x32c] sm:$0xf]
    %v359 = vld [vmem:[#allocation5 + $0x330] sm:$0xf]
    %v360 = vld [vmem:[#allocation5 + $0x334] sm:$0xf]
    %v361 = vld [vmem:[#allocation5 + $0x338] sm:$0xf]
    %v362 = vld [vmem:[#allocation5 + $0x33c] sm:$0xf]
    %v363 = vld [vmem:[#allocation5 + $0x340] sm:$0xf]
    %v364 = vld [vmem:[#allocation5 + $0x344] sm:$0xf]
    %v365 = vld [vmem:[#allocation5 + $0x348] sm:$0xf]
    %v366 = vld [vmem:[#allocation5 + $0x34c] sm:$0xf]
    %v367 = vld [vmem:[#allocation5 + $0x350] sm:$0xf]
    %v368 = vld [vmem:[#allocation5 + $0x354] sm:$0xf]
    %v369 = vld [vmem:[#allocation5 + $0x358] sm:$0xf]
    %v370 = vld [vmem:[#allocation5 + $0x35c] sm:$0xf]
    %v371 = vld [vmem:[#allocation5 + $0x360] sm:$0xf]
    %v372 = vld [vmem:[#allocation5 + $0x364] sm:$0xf]
    %v373 = vld [vmem:[#allocation5 + $0x368] sm:$0xf]
    %v374 = vld [vmem:[#allocation5 + $0x36c] sm:$0xf]
    %v375 = vld [vmem:[#allocation5 + $0x370] sm:$0xf]
    %v376 = vld [vmem:[#allocation5 + $0x374] sm:$0xf]
    %v377 = vld [vmem:[#allocation5 + $0x378] sm:$0xf]
    %v378 = vld [vmem:[#allocation5 + $0x37c] sm:$0xf]
    %v379 = vld [vmem:[#allocation5 + $0x380] sm:$0xf]
    %v380 = vld [vmem:[#allocation5 + $0x384] sm:$0xf]
    %v381 = vld [vmem:[#allocation5 + $0x388] sm:$0xf]
    %v382 = vld [vmem:[#allocation5 + $0x38c] sm:$0xf]
    %v383 = vld [vmem:[#allocation5 + $0x390] sm:$0xf]
    %v384 = vld [vmem:[#allocation5 + $0x394] sm:$0xf]
    %v385 = vld [vmem:[#allocation5 + $0x398] sm:$0xf]
    %v386 = vld [vmem:[#allocation5 + $0x39c] sm:$0xf]
    %v387 = vld [vmem:[#allocation5 + $0x3a0] sm:$0xf]
    %v388 = vld [vmem:[#allocation5 + $0x3a4] sm:$0xf]
    %v389 = vld [vmem:[#allocation5 + $0x3a8] sm:$0xf]
    %v390 = vld [vmem:[#allocation5 + $0x3ac] sm:$0xf]
    %v391 = vld [vmem:[#allocation5 + $0x3b0] sm:$0xf]
    %v392 = vld [vmem:[#allocation5 + $0x3b4] sm:$0xf]
    %v393 = vld [vmem:[#allocation5 + $0x3b8] sm:$0xf]
    %v394 = vld [vmem:[#allocation5 + $0x3bc] sm:$0xf]
    %v395 = vld [vmem:[#allocation5 + $0x3c0] sm:$0xf]
    %v396 = vld [vmem:[#allocation5 + $0x3c4] sm:$0xf]
    %v397 = vld [vmem:[#allocation5 + $0x3c8] sm:$0xf]
    %v398 = vld [vmem:[#allocation5 + $0x3cc] sm:$0xf]
    %v399 = vld [vmem:[#allocation5 + $0x3d0] sm:$0xf]
    %v400 = vld [vmem:[#allocation5 + $0x3d4] sm:$0xf]
    %v401 = vld [vmem:[#allocation5 + $0x3d8] sm:$0xf]
    %v402 = vld [vmem:[#allocation5 + $0x3dc] sm:$0xf]
    %v403 = vld [vmem:[#allocation5 + $0x3e0] sm:$0xf]
    %v404 = vld [vmem:[#allocation5 + $0x3e4] sm:$0xf]
    %v405 = vld [vmem:[#allocation5 + $0x3e8] sm:$0xf]
    %v406 = vld [vmem:[#allocation5 + $0x3ec] sm:$0xf]
    %v407 = vld [vmem:[#allocation5 + $0x3f0] sm:$0xf]
    %v408 = vld [vmem:[#allocation5 + $0x3f4] sm:$0xf]
    %v409 = vld [vmem:[#allocation5 + $0x3f8] sm:$0xf]
    %v410 = vld [vmem:[#allocation5 + $0x3fc] sm:$0xf]
    %v411 = vld [vmem:[#allocation5 + $0x400] sm:$0xf]
    %v412 = vld [vmem:[#allocation5 + $0x404] sm:$0xf]
    %v413 = vld [vmem:[#allocation5 + $0x408] sm:$0xf]
    %v414 = vld [vmem:[#allocation5 + $0x40c] sm:$0xf]
    %v415 = vld [vmem:[#allocation5 + $0x410] sm:$0xf]
    %v416 = vld [vmem:[#allocation5 + $0x414] sm:$0xf]
    %v417 = vld [vmem:[#allocation5 + $0x418] sm:$0xf]
    %v418 = vld [vmem:[#allocation5 + $0x41c] sm:$0xf]
    %v419 = vld [vmem:[#allocation5 + $0x420] sm:$0xf]
    %v420 = vld [vmem:[#allocation5 + $0x424] sm:$0xf]
    %v421 = vld [vmem:[#allocation5 + $0x428] sm:$0xf]
    %v422 = vld [vmem:[#allocation5 + $0x42c] sm:$0xf]
    %v423 = vld [vmem:[#allocation5 + $0x430] sm:$0xf]
    %v424 = vld [vmem:[#allocation5 + $0x434] sm:$0xf]
    %v425 = vld [vmem:[#allocation5 + $0x438] sm:$0xf]
    %v426 = vld [vmem:[#allocation5 + $0x43c] sm:$0xf]
    %v427 = vld [vmem:[#allocation5 + $0x440] sm:$0xf]
    %v428 = vld [vmem:[#allocation5 + $0x444] sm:$0xf]
    %v429 = vld [vmem:[#allocation5 + $0x448] sm:$0xf]
    %v430 = vld [vmem:[#allocation5 + $0x44c] sm:$0xf]
    %v431 = vld [vmem:[#allocation5 + $0x450] sm:$0xf]
    %v432 = vld [vmem:[#allocation5 + $0x454] sm:$0xf]
    %v433 = vld [vmem:[#allocation5 + $0x458] sm:$0xf]
    %v434 = vld [vmem:[#allocation5 + $0x45c] sm:$0xf]
    %v435 = vld [vmem:[#allocation5 + $0x460] sm:$0xf]
    %v436 = vld [vmem:[#allocation5 + $0x464] sm:$0xf]
    %v437 = vld [vmem:[#allocation5 + $0x468] sm:$0xf]
    %v438 = vld [vmem:[#allocation5 + $0x46c] sm:$0xf]
    %v439 = vld [vmem:[#allocation5 + $0x470] sm:$0xf]
    %v440 = vld [vmem:[#allocation5 + $0x474] sm:$0xf]
    %v441 = vld [vmem:[#allocation5 + $0x478] sm:$0xf]
    %v442 = vld [vmem:[#allocation5 + $0x47c] sm:$0xf]
    %v443 = vld [vmem:[#allocation5 + $0x480] sm:$0xf]
    %v444 = vld [vmem:[#allocation5 + $0x484] sm:$0xf]
    %v445 = vld [vmem:[#allocation5 + $0x488] sm:$0xf]
    %v446 = vld [vmem:[#allocation5 + $0x48c] sm:$0xf]
    %v447 = vld [vmem:[#allocation5 + $0x490] sm:$0xf]
    %v448 = vld [vmem:[#allocation5 + $0x494] sm:$0xf]
    %v449 = vld [vmem:[#allocation5 + $0x498] sm:$0xf]
    %v450 = vld [vmem:[#allocation5 + $0x49c] sm:$0xf]
    %v451 = vld [vmem:[#allocation5 + $0x4a0] sm:$0xf]
    %v452 = vld [vmem:[#allocation5 + $0x4a4] sm:$0xf]
    %v453 = vld [vmem:[#allocation5 + $0x4a8] sm:$0xf]
    %v454 = vld [vmem:[#allocation5 + $0x4ac] sm:$0xf]
    %v455 = vld [vmem:[#allocation5 + $0x4b0] sm:$0xf]
    %v456 = vld [vmem:[#allocation5 + $0x4b4] sm:$0xf]
    %v457 = vld [vmem:[#allocation5 + $0x4b8] sm:$0xf]
    %v458 = vld [vmem:[#allocation5 + $0x4bc] sm:$0xf]
    %v459 = vld [vmem:[#allocation5 + $0x4c0] sm:$0xf]
    %v460 = vld [vmem:[#allocation5 + $0x4c4] sm:$0xf]
    %v461 = vld [vmem:[#allocation5 + $0x4c8] sm:$0xf]
    %v462 = vld [vmem:[#allocation5 + $0x4cc] sm:$0xf]
    %v463 = vld [vmem:[#allocation5 + $0x4d0] sm:$0xf]
    %v464 = vld [vmem:[#allocation5 + $0x4d4] sm:$0xf]
    %v465 = vld [vmem:[#allocation5 + $0x4d8] sm:$0xf]
    %v466 = vld [vmem:[#allocation5 + $0x4dc] sm:$0xf]
    %v467 = vld [vmem:[#allocation5 + $0x4e0] sm:$0xf]
    %v468 = vld [vmem:[#allocation5 + $0x4e4] sm:$0xf]
    %v469 = vld [vmem:[#allocation5 + $0x4e8] sm:$0xf]
    %v470 = vld [vmem:[#allocation5 + $0x4ec] sm:$0xf]
    %v471 = vld [vmem:[#allocation5 + $0x4f0] sm:$0xf]
    %v472 = vld [vmem:[#allocation5 + $0x4f4] sm:$0xf]
    %v473 = vld [vmem:[#allocation5 + $0x4f8] sm:$0xf]
    %v474 = vld [vmem:[#allocation5 + $0x4fc] sm:$0xf]
    %v475 = vld [vmem:[#allocation5 + $0x500] sm:$0xf]
    %v476 = vld [vmem:[#allocation5 + $0x504] sm:$0xf]
    %v477 = vld [vmem:[#allocation5 + $0x508] sm:$0xf]
    %v478 = vld [vmem:[#allocation5 + $0x50c] sm:$0xf]
    %v479 = vld [vmem:[#allocation5 + $0x510] sm:$0xf]
    %v480 = vld [vmem:[#allocation5 + $0x514] sm:$0xf]
    %v481 = vld [vmem:[#allocation5 + $0x518] sm:$0xf]
    %v482 = vld [vmem:[#allocation5 + $0x51c] sm:$0xf]
    %v483 = vld [vmem:[#allocation5 + $0x520] sm:$0xf]
    %v484 = vld [vmem:[#allocation5 + $0x524] sm:$0xf]
    %v485 = vld [vmem:[#allocation5 + $0x528] sm:$0xf]
    %v486 = vld [vmem:[#allocation5 + $0x52c] sm:$0xf]
    %v487 = vld [vmem:[#allocation5 + $0x530] sm:$0xf]
    %v488 = vld [vmem:[#allocation5 + $0x534] sm:$0xf]
    %v489 = vld [vmem:[#allocation5 + $0x538] sm:$0xf]
    %v490 = vld [vmem:[#allocation5 + $0x53c] sm:$0xf]
    %v491 = vld [vmem:[#allocation5 + $0x540] sm:$0xf]
    %v492 = vld [vmem:[#allocation5 + $0x544] sm:$0xf]
    %v493 = vld [vmem:[#allocation5 + $0x548] sm:$0xf]
    %v494 = vld [vmem:[#allocation5 + $0x54c] sm:$0xf]
    %v495 = vld [vmem:[#allocation5 + $0x550] sm:$0xf]
    %v496 = vld [vmem:[#allocation5 + $0x554] sm:$0xf]
    %v497 = vld [vmem:[#allocation5 + $0x558] sm:$0xf]
    %v498 = vld [vmem:[#allocation5 + $0x55c] sm:$0xf]
    %v499 = vld [vmem:[#allocation5 + $0x560] sm:$0xf]
    %v500 = vld [vmem:[#allocation5 + $0x564] sm:$0xf]
    %v501 = vld [vmem:[#allocation5 + $0x568] sm:$0xf]
    %v502 = vld [vmem:[#allocation5 + $0x56c] sm:$0xf]
    %v503 = vld [vmem:[#allocation5 + $0x570] sm:$0xf]
    %v504 = vld [vmem:[#allocation5 + $0x574] sm:$0xf]
    %v505 = vld [vmem:[#allocation5 + $0x578] sm:$0xf]
    %v506 = vld [vmem:[#allocation5 + $0x57c] sm:$0xf]
    %v507 = vld [vmem:[#allocation5 + $0x580] sm:$0xf]
    %v508 = vld [vmem:[#allocation5 + $0x584] sm:$0xf]
    %v509 = vld [vmem:[#allocation5 + $0x588] sm:$0xf]
    %v510 = vld [vmem:[#allocation5 + $0x58c] sm:$0xf]
    %v511 = vld [vmem:[#allocation5 + $0x590] sm:$0xf]
    %v512 = vld [vmem:[#allocation5 + $0x594] sm:$0xf]
    %v513 = vld [vmem:[#allocation5 + $0x598] sm:$0xf]
    %v514 = vld [vmem:[#allocation5 + $0x59c] sm:$0xf]
    %v515 = vld [vmem:[#allocation5 + $0x5a0] sm:$0xf]
    %v516 = vld [vmem:[#allocation5 + $0x5a4] sm:$0xf]
    %v517 = vld [vmem:[#allocation5 + $0x5a8] sm:$0xf]
    %v518 = vld [vmem:[#allocation5 + $0x5ac] sm:$0xf]
    %v519 = vld [vmem:[#allocation5 + $0x5b0] sm:$0xf]
    %v520 = vld [vmem:[#allocation5 + $0x5b4] sm:$0xf]
    %v521 = vld [vmem:[#allocation5 + $0x5b8] sm:$0xf]
    %v522 = vld [vmem:[#allocation5 + $0x5bc] sm:$0xf]
    %v523 = vld [vmem:[#allocation5 + $0x5c0] sm:$0xf]
    %v524 = vld [vmem:[#allocation5 + $0x5c4] sm:$0xf]
    %v525 = vld [vmem:[#allocation5 + $0x5c8] sm:$0xf]
    %v526 = vld [vmem:[#allocation5 + $0x5cc] sm:$0xf]
    %v527 = vld [vmem:[#allocation5 + $0x5d0] sm:$0xf]
    %v528 = vld [vmem:[#allocation5 + $0x5d4] sm:$0xf]
    %v529 = vld [vmem:[#allocation5 + $0x5d8] sm:$0xf]
    %v530 = vld [vmem:[#allocation5 + $0x5dc] sm:$0xf]
    %v531 = vld [vmem:[#allocation5 + $0x5e0] sm:$0xf]
    %v532 = vld [vmem:[#allocation5 + $0x5e4] sm:$0xf]
    %v533 = vld [vmem:[#allocation5 + $0x5e8] sm:$0xf]
    %v534 = vld [vmem:[#allocation5 + $0x5ec] sm:$0xf]
    %v535 = vld [vmem:[#allocation5 + $0x5f0] sm:$0xf]
    %v536 = vld [vmem:[#allocation5 + $0x5f4] sm:$0xf]
    %v537 = vld [vmem:[#allocation5 + $0x5f8] sm:$0xf]
    %v538 = vld [vmem:[#allocation5 + $0x5fc] sm:$0xf]
    %v539 = vld [vmem:[%s2] sm:$0x1]
    %v541 = vlaneseq
    %v542 = vshrl.u32 %v541, 7
    %v543 = vsub.s32 0, %v542
    %v544 = vrot.slane %v539, %v543
    %v930 = vunpack.c.l.b16 %v155
    %v931 = vunpack.c.l.b16 %v156
    %v932 = vunpack.c.l.b16 %v157
    %v933 = vunpack.c.l.b16 %v158
    %v934 = vunpack.c.l.b16 %v159
    %v935 = vunpack.c.l.b16 %v160
    %v936 = vunpack.c.l.b16 %v161
    %v937 = vunpack.c.l.b16 %v162
    %v938 = vunpack.c.l.b16 %v163
    %v939 = vunpack.c.l.b16 %v164
    %v940 = vunpack.c.l.b16 %v165
    %v941 = vunpack.c.l.b16 %v166
    %v942 = vunpack.c.l.b16 %v167
    %v943 = vunpack.c.l.b16 %v168
    %v944 = vunpack.c.l.b16 %v169
    %v945 = vunpack.c.l.b16 %v170
    %v946 = vunpack.c.l.b16 %v171
    %v947 = vunpack.c.l.b16 %v172
    %v948 = vunpack.c.l.b16 %v173
    %v949 = vunpack.c.l.b16 %v174
    %v950 = vunpack.c.l.b16 %v175
    %v951 = vunpack.c.l.b16 %v176
    %v952 = vunpack.c.l.b16 %v177
    %v953 = vunpack.c.l.b16 %v178
    %v954 = vunpack.c.l.b16 %v179
    %v955 = vunpack.c.l.b16 %v180
    %v956 = vunpack.c.l.b16 %v181
    %v957 = vunpack.c.l.b16 %v182
    %v958 = vunpack.c.l.b16 %v183
    %v959 = vunpack.c.l.b16 %v184
    %v960 = vunpack.c.l.b16 %v185
    %v961 = vunpack.c.l.b16 %v186
    %v962 = vunpack.c.l.b16 %v187
    %v963 = vunpack.c.l.b16 %v188
    %v964 = vunpack.c.l.b16 %v189
    %v965 = vunpack.c.l.b16 %v190
    %v966 = vunpack.c.l.b16 %v191
    %v967 = vunpack.c.l.b16 %v192
    %v968 = vunpack.c.l.b16 %v193
    %v969 = vunpack.c.l.b16 %v194
    %v970 = vunpack.c.l.b16 %v195
    %v971 = vunpack.c.l.b16 %v196
    %v972 = vunpack.c.l.b16 %v197
    %v973 = vunpack.c.l.b16 %v198
    %v974 = vunpack.c.l.b16 %v199
    %v975 = vunpack.c.l.b16 %v200
    %v976 = vunpack.c.l.b16 %v201
    %v977 = vunpack.c.l.b16 %v202
    %v978 = vunpack.c.l.b16 %v203
    %v979 = vunpack.c.l.b16 %v204
    %v980 = vunpack.c.l.b16 %v205
    %v981 = vunpack.c.l.b16 %v206
    %v982 = vunpack.c.l.b16 %v207
    %v983 = vunpack.c.l.b16 %v208
    %v984 = vunpack.c.l.b16 %v209
    %v985 = vunpack.c.l.b16 %v210
    %v986 = vunpack.c.l.b16 %v211
    %v987 = vunpack.c.l.b16 %v212
    %v988 = vunpack.c.l.b16 %v213
    %v989 = vunpack.c.l.b16 %v214
    %v990 = vunpack.c.l.b16 %v215
    %v991 = vunpack.c.l.b16 %v216
    %v992 = vunpack.c.l.b16 %v217
    %v993 = vunpack.c.l.b16 %v218
    %v994 = vunpack.c.l.b16 %v219
    %v995 = vunpack.c.l.b16 %v220
    %v996 = vunpack.c.l.b16 %v221
    %v997 = vunpack.c.l.b16 %v222
    %v998 = vunpack.c.l.b16 %v223
    %v999 = vunpack.c.l.b16 %v224
    %v1000 = vunpack.c.l.b16 %v225
    %v1001 = vunpack.c.l.b16 %v226
    %v1002 = vunpack.c.l.b16 %v227
    %v1003 = vunpack.c.l.b16 %v228
    %v1004 = vunpack.c.l.b16 %v229
    %v1005 = vunpack.c.l.b16 %v230
    %v1006 = vunpack.c.l.b16 %v231
    %v1007 = vunpack.c.l.b16 %v232
    %v1008 = vunpack.c.l.b16 %v233
    %v1009 = vunpack.c.l.b16 %v234
    %v1010 = vunpack.c.l.b16 %v235
    %v1011 = vunpack.c.l.b16 %v236
    %v1012 = vunpack.c.l.b16 %v237
    %v1013 = vunpack.c.l.b16 %v238
    %v1014 = vunpack.c.l.b16 %v239
    %v1015 = vunpack.c.l.b16 %v240
    %v1016 = vunpack.c.l.b16 %v241
    %v1017 = vunpack.c.l.b16 %v242
    %v1018 = vunpack.c.l.b16 %v243
    %v1019 = vunpack.c.l.b16 %v244
    %v1020 = vunpack.c.l.b16 %v245
    %v1021 = vunpack.c.l.b16 %v246
    %v1022 = vunpack.c.l.b16 %v247
    %v1023 = vunpack.c.l.b16 %v248
    %v1024 = vunpack.c.l.b16 %v249
    %v1025 = vunpack.c.l.b16 %v250
    %v1026 = vunpack.c.l.b16 %v251
    %v1027 = vunpack.c.l.b16 %v252
    %v1028 = vunpack.c.l.b16 %v253
    %v1029 = vunpack.c.l.b16 %v254
    %v1030 = vunpack.c.l.b16 %v255
    %v1031 = vunpack.c.l.b16 %v256
    %v1032 = vunpack.c.l.b16 %v257
    %v1033 = vunpack.c.l.b16 %v258
    %v1034 = vunpack.c.l.b16 %v259
    %v1035 = vunpack.c.l.b16 %v260
    %v1036 = vunpack.c.l.b16 %v261
    %v1037 = vunpack.c.l.b16 %v262
    %v1038 = vunpack.c.l.b16 %v263
    %v1039 = vunpack.c.l.b16 %v264
    %v1040 = vunpack.c.l.b16 %v265
    %v1041 = vunpack.c.l.b16 %v266
    %v1042 = vunpack.c.l.b16 %v267
    %v1043 = vunpack.c.l.b16 %v268
    %v1044 = vunpack.c.l.b16 %v269
    %v1045 = vunpack.c.l.b16 %v270
    %v1046 = vunpack.c.l.b16 %v271
    %v1047 = vunpack.c.l.b16 %v272
    %v1048 = vunpack.c.l.b16 %v273
    %v1049 = vunpack.c.l.b16 %v274
    %v1050 = vunpack.c.l.b16 %v275
    %v1051 = vunpack.c.l.b16 %v276
    %v1052 = vunpack.c.l.b16 %v277
    %v1053 = vunpack.c.l.b16 %v278
    %v1054 = vunpack.c.l.b16 %v279
    %v1055 = vunpack.c.l.b16 %v280
    %v1056 = vunpack.c.l.b16 %v281
    %v1057 = vunpack.c.l.b16 %v282
    %v1058 = vunpack.c.l.b16 %v283
    %v1059 = vunpack.c.l.b16 %v284
    %v1060 = vunpack.c.l.b16 %v285
    %v1061 = vunpack.c.l.b16 %v286
    %v1062 = vunpack.c.l.b16 %v287
    %v1063 = vunpack.c.l.b16 %v288
    %v1064 = vunpack.c.l.b16 %v289
    %v1065 = vunpack.c.l.b16 %v290
    %v1066 = vunpack.c.l.b16 %v291
    %v1067 = vunpack.c.l.b16 %v292
    %v1068 = vunpack.c.l.b16 %v293
    %v1069 = vunpack.c.l.b16 %v294
    %v1070 = vunpack.c.l.b16 %v295
    %v1071 = vunpack.c.l.b16 %v296
    %v1072 = vunpack.c.l.b16 %v297
    %v1073 = vunpack.c.l.b16 %v298
    %v1074 = vunpack.c.l.b16 %v299
    %v1075 = vunpack.c.l.b16 %v300
    %v1076 = vunpack.c.l.b16 %v301
    %v1077 = vunpack.c.l.b16 %v302
    %v1078 = vunpack.c.l.b16 %v303
    %v1079 = vunpack.c.l.b16 %v304
    %v1080 = vunpack.c.l.b16 %v305
    %v1081 = vunpack.c.l.b16 %v306
    %v1082 = vunpack.c.l.b16 %v307
    %v1083 = vunpack.c.l.b16 %v308
    %v1084 = vunpack.c.l.b16 %v309
    %v1085 = vunpack.c.l.b16 %v310
    %v1086 = vunpack.c.l.b16 %v311
    %v1087 = vunpack.c.l.b16 %v312
    %v1088 = vunpack.c.l.b16 %v313
    %v1089 = vunpack.c.l.b16 %v314
    %v1090 = vunpack.c.l.b16 %v315
    %v1091 = vunpack.c.l.b16 %v316
    %v1092 = vunpack.c.l.b16 %v317
    %v1093 = vunpack.c.l.b16 %v318
    %v1094 = vunpack.c.l.b16 %v319
    %v1095 = vunpack.c.l.b16 %v320
    %v1096 = vunpack.c.l.b16 %v321
    %v1097 = vunpack.c.l.b16 %v322
    %v1098 = vunpack.c.l.b16 %v323
    %v1099 = vunpack.c.l.b16 %v324
    %v1100 = vunpack.c.l.b16 %v325
    %v1101 = vunpack.c.l.b16 %v326
    %v1102 = vunpack.c.l.b16 %v327
    %v1103 = vunpack.c.l.b16 %v328
    %v1104 = vunpack.c.l.b16 %v329
    %v1105 = vunpack.c.l.b16 %v330
    %v1106 = vunpack.c.l.b16 %v331
    %v1107 = vunpack.c.l.b16 %v332
    %v1108 = vunpack.c.l.b16 %v333
    %v1109 = vunpack.c.l.b16 %v334
    %v1110 = vunpack.c.l.b16 %v335
    %v1111 = vunpack.c.l.b16 %v336
    %v1112 = vunpack.c.l.b16 %v337
    %v1113 = vunpack.c.l.b16 %v338
    %v1114 = vunpack.c.l.b16 %v339
    %v1115 = vunpack.c.l.b16 %v340
    %v1116 = vunpack.c.l.b16 %v341
    %v1117 = vunpack.c.l.b16 %v342
    %v1118 = vunpack.c.l.b16 %v343
    %v1119 = vunpack.c.l.b16 %v344
    %v1120 = vunpack.c.l.b16 %v345
    %v1121 = vunpack.c.l.b16 %v346
    %v1122 = vunpack.c.l.b16 %v347
    %v1123 = vunpack.c.l.b16 %v348
    %v1124 = vunpack.c.l.b16 %v349
    %v1125 = vunpack.c.l.b16 %v350
    %v1126 = vunpack.c.l.b16 %v351
    %v1127 = vunpack.c.l.b16 %v352
    %v1128 = vunpack.c.l.b16 %v353
    %v1129 = vunpack.c.l.b16 %v354
    %v1130 = vunpack.c.l.b16 %v355
    %v1131 = vunpack.c.l.b16 %v356
    %v1132 = vunpack.c.l.b16 %v357
    %v1133 = vunpack.c.l.b16 %v358
    %v1134 = vunpack.c.l.b16 %v359
    %v1135 = vunpack.c.l.b16 %v360
    %v1136 = vunpack.c.l.b16 %v361
    %v1137 = vunpack.c.l.b16 %v362
    %v1138 = vunpack.c.l.b16 %v363
    %v1139 = vunpack.c.l.b16 %v364
    %v1140 = vunpack.c.l.b16 %v365
    %v1141 = vunpack.c.l.b16 %v366
    %v1142 = vunpack.c.l.b16 %v367
    %v1143 = vunpack.c.l.b16 %v368
    %v1144 = vunpack.c.l.b16 %v369
    %v1145 = vunpack.c.l.b16 %v370
    %v1146 = vunpack.c.l.b16 %v371
    %v1147 = vunpack.c.l.b16 %v372
    %v1148 = vunpack.c.l.b16 %v373
    %v1149 = vunpack.c.l.b16 %v374
    %v1150 = vunpack.c.l.b16 %v375
    %v1151 = vunpack.c.l.b16 %v376
    %v1152 = vunpack.c.l.b16 %v377
    %v1153 = vunpack.c.l.b16 %v378
    %v1154 = vunpack.c.l.b16 %v379
    %v1155 = vunpack.c.l.b16 %v380
    %v1156 = vunpack.c.l.b16 %v381
    %v1157 = vunpack.c.l.b16 %v382
    %v1158 = vunpack.c.l.b16 %v383
    %v1159 = vunpack.c.l.b16 %v384
    %v1160 = vunpack.c.l.b16 %v385
    %v1161 = vunpack.c.l.b16 %v386
    %v1162 = vunpack.c.l.b16 %v387
    %v1163 = vunpack.c.l.b16 %v388
    %v1164 = vunpack.c.l.b16 %v389
    %v1165 = vunpack.c.l.b16 %v390
    %v1166 = vunpack.c.l.b16 %v391
    %v1167 = vunpack.c.l.b16 %v392
    %v1168 = vunpack.c.l.b16 %v393
    %v1169 = vunpack.c.l.b16 %v394
    %v1170 = vunpack.c.l.b16 %v395
    %v1171 = vunpack.c.l.b16 %v396
    %v1172 = vunpack.c.l.b16 %v397
    %v1173 = vunpack.c.l.b16 %v398
    %v1174 = vunpack.c.l.b16 %v399
    %v1175 = vunpack.c.l.b16 %v400
    %v1176 = vunpack.c.l.b16 %v401
    %v1177 = vunpack.c.l.b16 %v402
    %v1178 = vunpack.c.l.b16 %v403
    %v1179 = vunpack.c.l.b16 %v404
    %v1180 = vunpack.c.l.b16 %v405
    %v1181 = vunpack.c.l.b16 %v406
    %v1182 = vunpack.c.l.b16 %v407
    %v1183 = vunpack.c.l.b16 %v408
    %v1184 = vunpack.c.l.b16 %v409
    %v1185 = vunpack.c.l.b16 %v410
    %v1186 = vunpack.c.l.b16 %v411
    %v1187 = vunpack.c.l.b16 %v412
    %v1188 = vunpack.c.l.b16 %v413
    %v1189 = vunpack.c.l.b16 %v414
    %v1190 = vunpack.c.l.b16 %v415
    %v1191 = vunpack.c.l.b16 %v416
    %v1192 = vunpack.c.l.b16 %v417
    %v1193 = vunpack.c.l.b16 %v418
    %v1194 = vunpack.c.l.b16 %v419
    %v1195 = vunpack.c.l.b16 %v420
    %v1196 = vunpack.c.l.b16 %v421
    %v1197 = vunpack.c.l.b16 %v422
    %v1198 = vunpack.c.l.b16 %v423
    %v1199 = vunpack.c.l.b16 %v424
    %v1200 = vunpack.c.l.b16 %v425
    %v1201 = vunpack.c.l.b16 %v426
    %v1202 = vunpack.c.l.b16 %v427
    %v1203 = vunpack.c.l.b16 %v428
    %v1204 = vunpack.c.l.b16 %v429
    %v1205 = vunpack.c.l.b16 %v430
    %v1206 = vunpack.c.l.b16 %v431
    %v1207 = vunpack.c.l.b16 %v432
    %v1208 = vunpack.c.l.b16 %v433
    %v1209 = vunpack.c.l.b16 %v434
    %v1210 = vunpack.c.l.b16 %v435
    %v1211 = vunpack.c.l.b16 %v436
    %v1212 = vunpack.c.l.b16 %v437
    %v1213 = vunpack.c.l.b16 %v438
    %v1214 = vunpack.c.l.b16 %v439
    %v1215 = vunpack.c.l.b16 %v440
    %v1216 = vunpack.c.l.b16 %v441
    %v1217 = vunpack.c.l.b16 %v442
    %v1218 = vunpack.c.l.b16 %v443
    %v1219 = vunpack.c.l.b16 %v444
    %v1220 = vunpack.c.l.b16 %v445
    %v1221 = vunpack.c.l.b16 %v446
    %v1222 = vunpack.c.l.b16 %v447
    %v1223 = vunpack.c.l.b16 %v448
    %v1224 = vunpack.c.l.b16 %v449
    %v1225 = vunpack.c.l.b16 %v450
    %v1226 = vunpack.c.l.b16 %v451
    %v1227 = vunpack.c.l.b16 %v452
    %v1228 = vunpack.c.l.b16 %v453
    %v1229 = vunpack.c.l.b16 %v454
    %v1230 = vunpack.c.l.b16 %v455
    %v1231 = vunpack.c.l.b16 %v456
    %v1232 = vunpack.c.l.b16 %v457
    %v1233 = vunpack.c.l.b16 %v458
    %v1234 = vunpack.c.l.b16 %v459
    %v1235 = vunpack.c.l.b16 %v460
    %v1236 = vunpack.c.l.b16 %v461
    %v1237 = vunpack.c.l.b16 %v462
    %v1238 = vunpack.c.l.b16 %v463
    %v1239 = vunpack.c.l.b16 %v464
    %v1240 = vunpack.c.l.b16 %v465
    %v1241 = vunpack.c.l.b16 %v466
    %v1242 = vunpack.c.l.b16 %v467
    %v1243 = vunpack.c.l.b16 %v468
    %v1244 = vunpack.c.l.b16 %v469
    %v1245 = vunpack.c.l.b16 %v470
    %v1246 = vunpack.c.l.b16 %v471
    %v1247 = vunpack.c.l.b16 %v472
    %v1248 = vunpack.c.l.b16 %v473
    %v1249 = vunpack.c.l.b16 %v474
    %v1250 = vunpack.c.l.b16 %v475
    %v1251 = vunpack.c.l.b16 %v476
    %v1252 = vunpack.c.l.b16 %v477
    %v1253 = vunpack.c.l.b16 %v478
    %v1254 = vunpack.c.l.b16 %v479
    %v1255 = vunpack.c.l.b16 %v480
    %v1256 = vunpack.c.l.b16 %v481
    %v1257 = vunpack.c.l.b16 %v482
    %v1258 = vunpack.c.l.b16 %v483
    %v1259 = vunpack.c.l.b16 %v484
    %v1260 = vunpack.c.l.b16 %v485
    %v1261 = vunpack.c.l.b16 %v486
    %v1262 = vunpack.c.l.b16 %v487
    %v1263 = vunpack.c.l.b16 %v488
    %v1264 = vunpack.c.l.b16 %v489
    %v1265 = vunpack.c.l.b16 %v490
    %v1266 = vunpack.c.l.b16 %v491
    %v1267 = vunpack.c.l.b16 %v492
    %v1268 = vunpack.c.l.b16 %v493
    %v1269 = vunpack.c.l.b16 %v494
    %v1270 = vunpack.c.l.b16 %v495
    %v1271 = vunpack.c.l.b16 %v496
    %v1272 = vunpack.c.l.b16 %v497
    %v1273 = vunpack.c.l.b16 %v498
    %v1274 = vunpack.c.l.b16 %v499
    %v1275 = vunpack.c.l.b16 %v500
    %v1276 = vunpack.c.l.b16 %v501
    %v1277 = vunpack.c.l.b16 %v502
    %v1278 = vunpack.c.l.b16 %v503
    %v1279 = vunpack.c.l.b16 %v504
    %v1280 = vunpack.c.l.b16 %v505
    %v1281 = vunpack.c.l.b16 %v506
    %v1282 = vunpack.c.l.b16 %v507
    %v1283 = vunpack.c.l.b16 %v508
    %v1284 = vunpack.c.l.b16 %v509
    %v1285 = vunpack.c.l.b16 %v510
    %v1286 = vunpack.c.l.b16 %v511
    %v1287 = vunpack.c.l.b16 %v512
    %v1288 = vunpack.c.l.b16 %v513
    %v1289 = vunpack.c.l.b16 %v514
    %v1290 = vunpack.c.l.b16 %v515
    %v1291 = vunpack.c.l.b16 %v516
    %v1292 = vunpack.c.l.b16 %v517
    %v1293 = vunpack.c.l.b16 %v518
    %v1294 = vunpack.c.l.b16 %v519
    %v1295 = vunpack.c.l.b16 %v520
    %v1296 = vunpack.c.l.b16 %v521
    %v1297 = vunpack.c.l.b16 %v522
    %v1298 = vunpack.c.l.b16 %v523
    %v1299 = vunpack.c.l.b16 %v524
    %v1300 = vunpack.c.l.b16 %v525
    %v1301 = vunpack.c.l.b16 %v526
    %v1302 = vunpack.c.l.b16 %v527
    %v1303 = vunpack.c.l.b16 %v528
    %v1304 = vunpack.c.l.b16 %v529
    %v1305 = vunpack.c.l.b16 %v530
    %v1306 = vunpack.c.l.b16 %v531
    %v1307 = vunpack.c.l.b16 %v532
    %v1308 = vunpack.c.l.b16 %v533
    %v1309 = vunpack.c.l.b16 %v534
    %v1310 = vunpack.c.l.b16 %v535
    %v1311 = vunpack.c.l.b16 %v536
    %v1312 = vunpack.c.l.b16 %v537
    %v1313 = vunpack.c.l.b16 %v538
    %v1314 = vpack.c.b16 %v931, %v930
    %v1315 = vpack.c.b16 %v933, %v932
    %v1316 = vpack.c.b16 %v935, %v934
    %v1317 = vpack.c.b16 %v937, %v936
    %v1318 = vpack.c.b16 %v939, %v938
    %v1319 = vpack.c.b16 %v941, %v940
    %v1320 = vpack.c.b16 %v943, %v942
    %v1321 = vpack.c.b16 %v945, %v944
    %v1322 = vpack.c.b16 %v947, %v946
    %v1323 = vpack.c.b16 %v949, %v948
    %v1324 = vpack.c.b16 %v951, %v950
    %v1325 = vpack.c.b16 %v953, %v952
    %v1326 = vpack.c.b16 %v955, %v954
    %v1327 = vpack.c.b16 %v957, %v956
    %v1328 = vpack.c.b16 %v959, %v958
    %v1329 = vpack.c.b16 %v961, %v960
    %v1330 = vpack.c.b16 %v963, %v962
    %v1331 = vpack.c.b16 %v965, %v964
    %v1332 = vpack.c.b16 %v967, %v966
    %v1333 = vpack.c.b16 %v969, %v968
    %v1334 = vpack.c.b16 %v971, %v970
    %v1335 = vpack.c.b16 %v973, %v972
    %v1336 = vpack.c.b16 %v975, %v974
    %v1337 = vpack.c.b16 %v977, %v976
    %v1338 = vpack.c.b16 %v979, %v978
    %v1339 = vpack.c.b16 %v981, %v980
    %v1340 = vpack.c.b16 %v983, %v982
    %v1341 = vpack.c.b16 %v985, %v984
    %v1342 = vpack.c.b16 %v987, %v986
    %v1343 = vpack.c.b16 %v989, %v988
    %v1344 = vpack.c.b16 %v991, %v990
    %v1345 = vpack.c.b16 %v993, %v992
    %v1346 = vpack.c.b16 %v995, %v994
    %v1347 = vpack.c.b16 %v997, %v996
    %v1348 = vpack.c.b16 %v999, %v998
    %v1349 = vpack.c.b16 %v1001, %v1000
    %v1350 = vpack.c.b16 %v1003, %v1002
    %v1351 = vpack.c.b16 %v1005, %v1004
    %v1352 = vpack.c.b16 %v1007, %v1006
    %v1353 = vpack.c.b16 %v1009, %v1008
    %v1354 = vpack.c.b16 %v1011, %v1010
    %v1355 = vpack.c.b16 %v1013, %v1012
    %v1356 = vpack.c.b16 %v1015, %v1014
    %v1357 = vpack.c.b16 %v1017, %v1016
    %v1358 = vpack.c.b16 %v1019, %v1018
    %v1359 = vpack.c.b16 %v1021, %v1020
    %v1360 = vpack.c.b16 %v1023, %v1022
    %v1361 = vpack.c.b16 %v1025, %v1024
    %v1362 = vpack.c.b16 %v1027, %v1026
    %v1363 = vpack.c.b16 %v1029, %v1028
    %v1364 = vpack.c.b16 %v1031, %v1030
    %v1365 = vpack.c.b16 %v1033, %v1032
    %v1366 = vpack.c.b16 %v1035, %v1034
    %v1367 = vpack.c.b16 %v1037, %v1036
    %v1368 = vpack.c.b16 %v1039, %v1038
    %v1369 = vpack.c.b16 %v1041, %v1040
    %v1370 = vpack.c.b16 %v1043, %v1042
    %v1371 = vpack.c.b16 %v1045, %v1044
    %v1372 = vpack.c.b16 %v1047, %v1046
    %v1373 = vpack.c.b16 %v1049, %v1048
    %v1374 = vpack.c.b16 %v1051, %v1050
    %v1375 = vpack.c.b16 %v1053, %v1052
    %v1376 = vpack.c.b16 %v1055, %v1054
    %v1377 = vpack.c.b16 %v1057, %v1056
    %v1378 = vpack.c.b16 %v1059, %v1058
    %v1379 = vpack.c.b16 %v1061, %v1060
    %v1380 = vpack.c.b16 %v1063, %v1062
    %v1381 = vpack.c.b16 %v1065, %v1064
    %v1382 = vpack.c.b16 %v1067, %v1066
    %v1383 = vpack.c.b16 %v1069, %v1068
    %v1384 = vpack.c.b16 %v1071, %v1070
    %v1385 = vpack.c.b16 %v1073, %v1072
    %v1386 = vpack.c.b16 %v1075, %v1074
    %v1387 = vpack.c.b16 %v1077, %v1076
    %v1388 = vpack.c.b16 %v1079, %v1078
    %v1389 = vpack.c.b16 %v1081, %v1080
    %v1390 = vpack.c.b16 %v1083, %v1082
    %v1391 = vpack.c.b16 %v1085, %v1084
    %v1392 = vpack.c.b16 %v1087, %v1086
    %v1393 = vpack.c.b16 %v1089, %v1088
    %v1394 = vpack.c.b16 %v1091, %v1090
    %v1395 = vpack.c.b16 %v1093, %v1092
    %v1396 = vpack.c.b16 %v1095, %v1094
    %v1397 = vpack.c.b16 %v1097, %v1096
    %v1398 = vpack.c.b16 %v1099, %v1098
    %v1399 = vpack.c.b16 %v1101, %v1100
    %v1400 = vpack.c.b16 %v1103, %v1102
    %v1401 = vpack.c.b16 %v1105, %v1104
    %v1402 = vpack.c.b16 %v1107, %v1106
    %v1403 = vpack.c.b16 %v1109, %v1108
    %v1404 = vpack.c.b16 %v1111, %v1110
    %v1405 = vpack.c.b16 %v1113, %v1112
    %v1406 = vpack.c.b16 %v1115, %v1114
    %v1407 = vpack.c.b16 %v1117, %v1116
    %v1408 = vpack.c.b16 %v1119, %v1118
    %v1409 = vpack.c.b16 %v1121, %v1120
    %v1410 = vpack.c.b16 %v1123, %v1122
    %v1411 = vpack.c.b16 %v1125, %v1124
    %v1412 = vpack.c.b16 %v1127, %v1126
    %v1413 = vpack.c.b16 %v1129, %v1128
    %v1414 = vpack.c.b16 %v1131, %v1130
    %v1415 = vpack.c.b16 %v1133, %v1132
    %v1416 = vpack.c.b16 %v1135, %v1134
    %v1417 = vpack.c.b16 %v1137, %v1136
    %v1418 = vpack.c.b16 %v1139, %v1138
    %v1419 = vpack.c.b16 %v1141, %v1140
    %v1420 = vpack.c.b16 %v1143, %v1142
    %v1421 = vpack.c.b16 %v1145, %v1144
    %v1422 = vpack.c.b16 %v1147, %v1146
    %v1423 = vpack.c.b16 %v1149, %v1148
    %v1424 = vpack.c.b16 %v1151, %v1150
    %v1425 = vpack.c.b16 %v1153, %v1152
    %v1426 = vpack.c.b16 %v1155, %v1154
    %v1427 = vpack.c.b16 %v1157, %v1156
    %v1428 = vpack.c.b16 %v1159, %v1158
    %v1429 = vpack.c.b16 %v1161, %v1160
    %v1430 = vpack.c.b16 %v1163, %v1162
    %v1431 = vpack.c.b16 %v1165, %v1164
    %v1432 = vpack.c.b16 %v1167, %v1166
    %v1433 = vpack.c.b16 %v1169, %v1168
    %v1434 = vpack.c.b16 %v1171, %v1170
    %v1435 = vpack.c.b16 %v1173, %v1172
    %v1436 = vpack.c.b16 %v1175, %v1174
    %v1437 = vpack.c.b16 %v1177, %v1176
    %v1438 = vpack.c.b16 %v1179, %v1178
    %v1439 = vpack.c.b16 %v1181, %v1180
    %v1440 = vpack.c.b16 %v1183, %v1182
    %v1441 = vpack.c.b16 %v1185, %v1184
    %v1442 = vpack.c.b16 %v1187, %v1186
    %v1443 = vpack.c.b16 %v1189, %v1188
    %v1444 = vpack.c.b16 %v1191, %v1190
    %v1445 = vpack.c.b16 %v1193, %v1192
    %v1446 = vpack.c.b16 %v1195, %v1194
    %v1447 = vpack.c.b16 %v1197, %v1196
    %v1448 = vpack.c.b16 %v1199, %v1198
    %v1449 = vpack.c.b16 %v1201, %v1200
    %v1450 = vpack.c.b16 %v1203, %v1202
    %v1451 = vpack.c.b16 %v1205, %v1204
    %v1452 = vpack.c.b16 %v1207, %v1206
    %v1453 = vpack.c.b16 %v1209, %v1208
    %v1454 = vpack.c.b16 %v1211, %v1210
    %v1455 = vpack.c.b16 %v1213, %v1212
    %v1456 = vpack.c.b16 %v1215, %v1214
    %v1457 = vpack.c.b16 %v1217, %v1216
    %v1458 = vpack.c.b16 %v1219, %v1218
    %v1459 = vpack.c.b16 %v1221, %v1220
    %v1460 = vpack.c.b16 %v1223, %v1222
    %v1461 = vpack.c.b16 %v1225, %v1224
    %v1462 = vpack.c.b16 %v1227, %v1226
    %v1463 = vpack.c.b16 %v1229, %v1228
    %v1464 = vpack.c.b16 %v1231, %v1230
    %v1465 = vpack.c.b16 %v1233, %v1232
    %v1466 = vpack.c.b16 %v1235, %v1234
    %v1467 = vpack.c.b16 %v1237, %v1236
    %v1468 = vpack.c.b16 %v1239, %v1238
    %v1469 = vpack.c.b16 %v1241, %v1240
    %v1470 = vpack.c.b16 %v1243, %v1242
    %v1471 = vpack.c.b16 %v1245, %v1244
    %v1472 = vpack.c.b16 %v1247, %v1246
    %v1473 = vpack.c.b16 %v1249, %v1248
    %v1474 = vpack.c.b16 %v1251, %v1250
    %v1475 = vpack.c.b16 %v1253, %v1252
    %v1476 = vpack.c.b16 %v1255, %v1254
    %v1477 = vpack.c.b16 %v1257, %v1256
    %v1478 = vpack.c.b16 %v1259, %v1258
    %v1479 = vpack.c.b16 %v1261, %v1260
    %v1480 = vpack.c.b16 %v1263, %v1262
    %v1481 = vpack.c.b16 %v1265, %v1264
    %v1482 = vpack.c.b16 %v1267, %v1266
    %v1483 = vpack.c.b16 %v1269, %v1268
    %v1484 = vpack.c.b16 %v1271, %v1270
    %v1485 = vpack.c.b16 %v1273, %v1272
    %v1486 = vpack.c.b16 %v1275, %v1274
    %v1487 = vpack.c.b16 %v1277, %v1276
    %v1488 = vpack.c.b16 %v1279, %v1278
    %v1489 = vpack.c.b16 %v1281, %v1280
    %v1490 = vpack.c.b16 %v1283, %v1282
    %v1491 = vpack.c.b16 %v1285, %v1284
    %v1492 = vpack.c.b16 %v1287, %v1286
    %v1493 = vpack.c.b16 %v1289, %v1288
    %v1494 = vpack.c.b16 %v1291, %v1290
    %v1495 = vpack.c.b16 %v1293, %v1292
    %v1496 = vpack.c.b16 %v1295, %v1294
    %v1497 = vpack.c.b16 %v1297, %v1296
    %v1498 = vpack.c.b16 %v1299, %v1298
    %v1499 = vpack.c.b16 %v1301, %v1300
    %v1500 = vpack.c.b16 %v1303, %v1302
    %v1501 = vpack.c.b16 %v1305, %v1304
    %v1502 = vpack.c.b16 %v1307, %v1306
    %v1503 = vpack.c.b16 %v1309, %v1308
    %v1504 = vpack.c.b16 %v1311, %v1310
    %v1505 = vpack.c.b16 %v1313, %v1312
    %1698 = vmatprep.subr.bf16.mxu0 0
    %1699 = vmatpush1.bf16.msra.mxu0 %v1321
    %1700 = vmatprep.subr.bf16.mxu0 0
    %1701 = vmatpush1.bf16.msra.mxu0 %v1320
    %1702 = vmatprep.subr.bf16.mxu0 0
    %1703 = vmatpush1.bf16.msra.mxu0 %v1319
    %1704 = vmatprep.subr.bf16.mxu0 0
    %1705 = vmatpush1.bf16.msra.mxu0 %v1318
    %1706 = vmatprep.subr.bf16.mxu0 0
    %1707 = vmatpush1.bf16.msra.mxu0 %v1317
    %1708 = vmatprep.subr.bf16.mxu0 0
    %1709 = vmatpush1.bf16.msra.mxu0 %v1316
    %1710 = vmatprep.subr.bf16.mxu0 0
    %1711 = vmatpush1.bf16.msra.mxu0 %v1315
    %1712 = vmatprep.subr.bf16.mxu0 0
    %1713 = vmatpush1.bf16.msra.mxu0 %v1314
    %1714 = vmatprep.subr.bf16.mxu0 0
    %1715 = vmatpush2.bf16.msra.mxu0 %v1329
    %1716 = vmatprep.subr.bf16.mxu0 0
    %1717 = vmatpush2.bf16.msra.mxu0 %v1328
    %1718 = vmatprep.subr.bf16.mxu0 0
    %1719 = vmatpush2.bf16.msra.mxu0 %v1327
    %1720 = vmatprep.subr.bf16.mxu0 0
    %1721 = vmatpush2.bf16.msra.mxu0 %v1326
    %1722 = vmatprep.subr.bf16.mxu0 0
    %1723 = vmatpush2.bf16.msra.mxu0 %v1325
    %1724 = vmatprep.subr.bf16.mxu0 0
    %1725 = vmatpush2.bf16.msra.mxu0 %v1324
    %1726 = vmatprep.subr.bf16.mxu0 0
    %1727 = vmatpush2.bf16.msra.mxu0 %v1323
    %1728 = vmatprep.subr.bf16.mxu0 0
    %1729 = vmatpush2.bf16.msra.mxu0 %v1322
    %1730 = vmatprep.mubr.bf16.mxu0 %v132
    %1731 = vmatmul.mubr.bf16.gmra.mxu0 %v131
    %v1732 = vpop.f32.mrf.mxu0
    %v1733 = vadd.f32 %v544, %v1732
    %v1734 = vpop.f32.mrf.mxu0
    %v1735 = vpop.f32.mrf.mxu0
    %v1736 = vadd.f32 %v544, %v1735
    %v1737 = vpop.f32.mrf.mxu0
    %1738 = vdwg.mxu0
    %1739 = vmatprep.subr.bf16.mxu0 0
    %1740 = vmatpush1.bf16.msra.mxu0 %v1337
    %1741 = vmatprep.subr.bf16.mxu0 0
    %1742 = vmatpush1.bf16.msra.mxu0 %v1336
    %1743 = vmatprep.subr.bf16.mxu0 0
    %1744 = vmatpush1.bf16.msra.mxu0 %v1335
    %1745 = vmatprep.subr.bf16.mxu0 0
    %1746 = vmatpush1.bf16.msra.mxu0 %v1334
    %1747 = vmatprep.subr.bf16.mxu0 0
    %1748 = vmatpush1.bf16.msra.mxu0 %v1333
    %1749 = vmatprep.subr.bf16.mxu0 0
    %1750 = vmatpush1.bf16.msra.mxu0 %v1332
    %1751 = vmatprep.subr.bf16.mxu0 0
    %1752 = vmatpush1.bf16.msra.mxu0 %v1331
    %1753 = vmatprep.subr.bf16.mxu0 0
    %1754 = vmatpush1.bf16.msra.mxu0 %v1330
    %1755 = vmatprep.subr.bf16.mxu0 0
    %1756 = vmatpush2.bf16.msra.mxu0 %v1345
    %1757 = vmatprep.subr.bf16.mxu0 0
    %1758 = vmatpush2.bf16.msra.mxu0 %v1344
    %1759 = vmatprep.subr.bf16.mxu0 0
    %1760 = vmatpush2.bf16.msra.mxu0 %v1343
    %1761 = vmatprep.subr.bf16.mxu0 0
    %1762 = vmatpush2.bf16.msra.mxu0 %v1342
    %1763 = vmatprep.subr.bf16.mxu0 0
    %1764 = vmatpush2.bf16.msra.mxu0 %v1341
    %1765 = vmatprep.subr.bf16.mxu0 0
    %1766 = vmatpush2.bf16.msra.mxu0 %v1340
    %1767 = vmatprep.subr.bf16.mxu0 0
    %1768 = vmatpush2.bf16.msra.mxu0 %v1339
    %1769 = vmatprep.subr.bf16.mxu0 0
    %1770 = vmatpush2.bf16.msra.mxu0 %v1338
    %1771 = vmatprep.mubr.bf16.mxu0 %v134
    %1772 = vmatmul.mubr.bf16.gmra.mxu0 %v133
    %v1773 = vpop.f32.mrf.mxu0
    %v1774 = vadd.f32 %v1733, %v1773
    %v1775 = vpop.f32.mrf.mxu0
    %v1776 = vpop.f32.mrf.mxu0
    %v1777 = vadd.f32 %v1736, %v1776
    %v1778 = vpop.f32.mrf.mxu0
    %1779 = vdwg.mxu0
    %1780 = vmatprep.subr.bf16.mxu0 0
    %1781 = vmatpush1.bf16.msra.mxu0 %v1353
    %1782 = vmatprep.subr.bf16.mxu0 0
    %1783 = vmatpush1.bf16.msra.mxu0 %v1352
    %1784 = vmatprep.subr.bf16.mxu0 0
    %1785 = vmatpush1.bf16.msra.mxu0 %v1351
    %1786 = vmatprep.subr.bf16.mxu0 0
    %1787 = vmatpush1.bf16.msra.mxu0 %v1350
    %1788 = vmatprep.subr.bf16.mxu0 0
    %1789 = vmatpush1.bf16.msra.mxu0 %v1349
    %1790 = vmatprep.subr.bf16.mxu0 0
    %1791 = vmatpush1.bf16.msra.mxu0 %v1348
    %1792 = vmatprep.subr.bf16.mxu0 0
    %1793 = vmatpush1.bf16.msra.mxu0 %v1347
    %1794 = vmatprep.subr.bf16.mxu0 0
    %1795 = vmatpush1.bf16.msra.mxu0 %v1346
    %1796 = vmatprep.subr.bf16.mxu0 0
    %1797 = vmatpush2.bf16.msra.mxu0 %v1361
    %1798 = vmatprep.subr.bf16.mxu0 0
    %1799 = vmatpush2.bf16.msra.mxu0 %v1360
    %1800 = vmatprep.subr.bf16.mxu0 0
    %1801 = vmatpush2.bf16.msra.mxu0 %v1359
    %1802 = vmatprep.subr.bf16.mxu0 0
    %1803 = vmatpush2.bf16.msra.mxu0 %v1358
    %1804 = vmatprep.subr.bf16.mxu0 0
    %1805 = vmatpush2.bf16.msra.mxu0 %v1357
    %1806 = vmatprep.subr.bf16.mxu0 0
    %1807 = vmatpush2.bf16.msra.mxu0 %v1356
    %1808 = vmatprep.subr.bf16.mxu0 0
    %1809 = vmatpush2.bf16.msra.mxu0 %v1355
    %1810 = vmatprep.subr.bf16.mxu0 0
    %1811 = vmatpush2.bf16.msra.mxu0 %v1354
    %1812 = vmatprep.mubr.bf16.mxu0 %v136
    %1813 = vmatmul.mubr.bf16.gmra.mxu0 %v135
    %v1814 = vpop.f32.mrf.mxu0
    %v1815 = vadd.f32 %v1774, %v1814
    %v1816 = vpop.f32.mrf.mxu0
    %v1817 = vpop.f32.mrf.mxu0
    %v1818 = vadd.f32 %v1777, %v1817
    %v1819 = vpop.f32.mrf.mxu0
    %1820 = vdwg.mxu0
    %1821 = vmatprep.subr.bf16.mxu0 0
    %1822 = vmatpush1.bf16.msra.mxu0 %v1369
    %1823 = vmatprep.subr.bf16.mxu0 0
    %1824 = vmatpush1.bf16.msra.mxu0 %v1368
    %1825 = vmatprep.subr.bf16.mxu0 0
    %1826 = vmatpush1.bf16.msra.mxu0 %v1367
    %1827 = vmatprep.subr.bf16.mxu0 0
    %1828 = vmatpush1.bf16.msra.mxu0 %v1366
    %1829 = vmatprep.subr.bf16.mxu0 0
    %1830 = vmatpush1.bf16.msra.mxu0 %v1365
    %1831 = vmatprep.subr.bf16.mxu0 0
    %1832 = vmatpush1.bf16.msra.mxu0 %v1364
    %1833 = vmatprep.subr.bf16.mxu0 0
    %1834 = vmatpush1.bf16.msra.mxu0 %v1363
    %1835 = vmatprep.subr.bf16.mxu0 0
    %1836 = vmatpush1.bf16.msra.mxu0 %v1362
    %1837 = vmatprep.subr.bf16.mxu0 0
    %1838 = vmatpush2.bf16.msra.mxu0 %v1377
    %1839 = vmatprep.subr.bf16.mxu0 0
    %1840 = vmatpush2.bf16.msra.mxu0 %v1376
    %1841 = vmatprep.subr.bf16.mxu0 0
    %1842 = vmatpush2.bf16.msra.mxu0 %v1375
    %1843 = vmatprep.subr.bf16.mxu0 0
    %1844 = vmatpush2.bf16.msra.mxu0 %v1374
    %1845 = vmatprep.subr.bf16.mxu0 0
    %1846 = vmatpush2.bf16.msra.mxu0 %v1373
    %1847 = vmatprep.subr.bf16.mxu0 0
    %1848 = vmatpush2.bf16.msra.mxu0 %v1372
    %1849 = vmatprep.subr.bf16.mxu0 0
    %1850 = vmatpush2.bf16.msra.mxu0 %v1371
    %1851 = vmatprep.subr.bf16.mxu0 0
    %1852 = vmatpush2.bf16.msra.mxu0 %v1370
    %1853 = vmatprep.mubr.bf16.mxu0 %v138
    %1854 = vmatmul.mubr.bf16.gmra.mxu0 %v137
    %v1855 = vpop.f32.mrf.mxu0
    %v1856 = vadd.f32 %v1815, %v1855
    %v1857 = vpop.f32.mrf.mxu0
    %v1858 = vpop.f32.mrf.mxu0
    %v1859 = vadd.f32 %v1818, %v1858
    %v1860 = vpop.f32.mrf.mxu0
    %1861 = vdwg.mxu0
    %1862 = vmatprep.subr.bf16.mxu0 0
    %1863 = vmatpush1.bf16.msra.mxu0 %v1385
    %1864 = vmatprep.subr.bf16.mxu0 0
    %1865 = vmatpush1.bf16.msra.mxu0 %v1384
    %1866 = vmatprep.subr.bf16.mxu0 0
    %1867 = vmatpush1.bf16.msra.mxu0 %v1383
    %1868 = vmatprep.subr.bf16.mxu0 0
    %1869 = vmatpush1.bf16.msra.mxu0 %v1382
    %1870 = vmatprep.subr.bf16.mxu0 0
    %1871 = vmatpush1.bf16.msra.mxu0 %v1381
    %1872 = vmatprep.subr.bf16.mxu0 0
    %1873 = vmatpush1.bf16.msra.mxu0 %v1380
    %1874 = vmatprep.subr.bf16.mxu0 0
    %1875 = vmatpush1.bf16.msra.mxu0 %v1379
    %1876 = vmatprep.subr.bf16.mxu0 0
    %1877 = vmatpush1.bf16.msra.mxu0 %v1378
    %1878 = vmatprep.subr.bf16.mxu0 0
    %1879 = vmatpush2.bf16.msra.mxu0 %v1393
    %1880 = vmatprep.subr.bf16.mxu0 0
    %1881 = vmatpush2.bf16.msra.mxu0 %v1392
    %1882 = vmatprep.subr.bf16.mxu0 0
    %1883 = vmatpush2.bf16.msra.mxu0 %v1391
    %1884 = vmatprep.subr.bf16.mxu0 0
    %1885 = vmatpush2.bf16.msra.mxu0 %v1390
    %1886 = vmatprep.subr.bf16.mxu0 0
    %1887 = vmatpush2.bf16.msra.mxu0 %v1389
    %1888 = vmatprep.subr.bf16.mxu0 0
    %1889 = vmatpush2.bf16.msra.mxu0 %v1388
    %1890 = vmatprep.subr.bf16.mxu0 0
    %1891 = vmatpush2.bf16.msra.mxu0 %v1387
    %1892 = vmatprep.subr.bf16.mxu0 0
    %1893 = vmatpush2.bf16.msra.mxu0 %v1386
    %1894 = vmatprep.mubr.bf16.mxu0 %v140
    %1895 = vmatmul.mubr.bf16.gmra.mxu0 %v139
    %v1896 = vpop.f32.mrf.mxu0
    %v1897 = vadd.f32 %v1856, %v1896
    %v1898 = vpop.f32.mrf.mxu0
    %v1899 = vpop.f32.mrf.mxu0
    %v1900 = vadd.f32 %v1859, %v1899
    %v1901 = vpop.f32.mrf.mxu0
    %1902 = vdwg.mxu0
    %1903 = vmatprep.subr.bf16.mxu0 0
    %1904 = vmatpush1.bf16.msra.mxu0 %v1401
    %1905 = vmatprep.subr.bf16.mxu0 0
    %1906 = vmatpush1.bf16.msra.mxu0 %v1400
    %1907 = vmatprep.subr.bf16.mxu0 0
    %1908 = vmatpush1.bf16.msra.mxu0 %v1399
    %1909 = vmatprep.subr.bf16.mxu0 0
    %1910 = vmatpush1.bf16.msra.mxu0 %v1398
    %1911 = vmatprep.subr.bf16.mxu0 0
    %1912 = vmatpush1.bf16.msra.mxu0 %v1397
    %1913 = vmatprep.subr.bf16.mxu0 0
    %1914 = vmatpush1.bf16.msra.mxu0 %v1396
    %1915 = vmatprep.subr.bf16.mxu0 0
    %1916 = vmatpush1.bf16.msra.mxu0 %v1395
    %1917 = vmatprep.subr.bf16.mxu0 0
    %1918 = vmatpush1.bf16.msra.mxu0 %v1394
    %1919 = vmatprep.subr.bf16.mxu0 0
    %1920 = vmatpush2.bf16.msra.mxu0 %v1409
    %1921 = vmatprep.subr.bf16.mxu0 0
    %1922 = vmatpush2.bf16.msra.mxu0 %v1408
    %1923 = vmatprep.subr.bf16.mxu0 0
    %1924 = vmatpush2.bf16.msra.mxu0 %v1407
    %1925 = vmatprep.subr.bf16.mxu0 0
    %1926 = vmatpush2.bf16.msra.mxu0 %v1406
    %1927 = vmatprep.subr.bf16.mxu0 0
    %1928 = vmatpush2.bf16.msra.mxu0 %v1405
    %1929 = vmatprep.subr.bf16.mxu0 0
    %1930 = vmatpush2.bf16.msra.mxu0 %v1404
    %1931 = vmatprep.subr.bf16.mxu0 0
    %1932 = vmatpush2.bf16.msra.mxu0 %v1403
    %1933 = vmatprep.subr.bf16.mxu0 0
    %1934 = vmatpush2.bf16.msra.mxu0 %v1402
    %1935 = vmatprep.mubr.bf16.mxu0 %v142
    %1936 = vmatmul.mubr.bf16.gmra.mxu0 %v141
    %v1937 = vpop.f32.mrf.mxu0
    %v1938 = vadd.f32 %v1897, %v1937
    %v1939 = vpop.f32.mrf.mxu0
    %v1940 = vpop.f32.mrf.mxu0
    %v1941 = vadd.f32 %v1900, %v1940
    %v1942 = vpop.f32.mrf.mxu0
    %1943 = vdwg.mxu0
    %1944 = vmatprep.subr.bf16.mxu0 0
    %1945 = vmatpush1.bf16.msra.mxu0 %v1417
    %1946 = vmatprep.subr.bf16.mxu0 0
    %1947 = vmatpush1.bf16.msra.mxu0 %v1416
    %1948 = vmatprep.subr.bf16.mxu0 0
    %1949 = vmatpush1.bf16.msra.mxu0 %v1415
    %1950 = vmatprep.subr.bf16.mxu0 0
    %1951 = vmatpush1.bf16.msra.mxu0 %v1414
    %1952 = vmatprep.subr.bf16.mxu0 0
    %1953 = vmatpush1.bf16.msra.mxu0 %v1413
    %1954 = vmatprep.subr.bf16.mxu0 0
    %1955 = vmatpush1.bf16.msra.mxu0 %v1412
    %1956 = vmatprep.subr.bf16.mxu0 0
    %1957 = vmatpush1.bf16.msra.mxu0 %v1411
    %1958 = vmatprep.subr.bf16.mxu0 0
    %1959 = vmatpush1.bf16.msra.mxu0 %v1410
    %1960 = vmatprep.subr.bf16.mxu0 0
    %1961 = vmatpush2.bf16.msra.mxu0 %v1425
    %1962 = vmatprep.subr.bf16.mxu0 0
    %1963 = vmatpush2.bf16.msra.mxu0 %v1424
    %1964 = vmatprep.subr.bf16.mxu0 0
    %1965 = vmatpush2.bf16.msra.mxu0 %v1423
    %1966 = vmatprep.subr.bf16.mxu0 0
    %1967 = vmatpush2.bf16.msra.mxu0 %v1422
    %1968 = vmatprep.subr.bf16.mxu0 0
    %1969 = vmatpush2.bf16.msra.mxu0 %v1421
    %1970 = vmatprep.subr.bf16.mxu0 0
    %1971 = vmatpush2.bf16.msra.mxu0 %v1420
    %1972 = vmatprep.subr.bf16.mxu0 0
    %1973 = vmatpush2.bf16.msra.mxu0 %v1419
    %1974 = vmatprep.subr.bf16.mxu0 0
    %1975 = vmatpush2.bf16.msra.mxu0 %v1418
    %1976 = vmatprep.mubr.bf16.mxu0 %v144
    %1977 = vmatmul.mubr.bf16.gmra.mxu0 %v143
    %v1978 = vpop.f32.mrf.mxu0
    %v1979 = vadd.f32 %v1938, %v1978
    %v1980 = vpop.f32.mrf.mxu0
    %v1981 = vpop.f32.mrf.mxu0
    %v1982 = vadd.f32 %v1941, %v1981
    %v1983 = vpop.f32.mrf.mxu0
    %1984 = vdwg.mxu0
    %1985 = vmatprep.subr.bf16.mxu0 0
    %1986 = vmatpush1.bf16.msra.mxu0 %v1433
    %1987 = vmatprep.subr.bf16.mxu0 0
    %1988 = vmatpush1.bf16.msra.mxu0 %v1432
    %1989 = vmatprep.subr.bf16.mxu0 0
    %1990 = vmatpush1.bf16.msra.mxu0 %v1431
    %1991 = vmatprep.subr.bf16.mxu0 0
    %1992 = vmatpush1.bf16.msra.mxu0 %v1430
    %1993 = vmatprep.subr.bf16.mxu0 0
    %1994 = vmatpush1.bf16.msra.mxu0 %v1429
    %1995 = vmatprep.subr.bf16.mxu0 0
    %1996 = vmatpush1.bf16.msra.mxu0 %v1428
    %1997 = vmatprep.subr.bf16.mxu0 0
    %1998 = vmatpush1.bf16.msra.mxu0 %v1427
    %1999 = vmatprep.subr.bf16.mxu0 0
    %2000 = vmatpush1.bf16.msra.mxu0 %v1426
    %2001 = vmatprep.subr.bf16.mxu0 0
    %2002 = vmatpush2.bf16.msra.mxu0 %v1441
    %2003 = vmatprep.subr.bf16.mxu0 0
    %2004 = vmatpush2.bf16.msra.mxu0 %v1440
    %2005 = vmatprep.subr.bf16.mxu0 0
    %2006 = vmatpush2.bf16.msra.mxu0 %v1439
    %2007 = vmatprep.subr.bf16.mxu0 0
    %2008 = vmatpush2.bf16.msra.mxu0 %v1438
    %2009 = vmatprep.subr.bf16.mxu0 0
    %2010 = vmatpush2.bf16.msra.mxu0 %v1437
    %2011 = vmatprep.subr.bf16.mxu0 0
    %2012 = vmatpush2.bf16.msra.mxu0 %v1436
    %2013 = vmatprep.subr.bf16.mxu0 0
    %2014 = vmatpush2.bf16.msra.mxu0 %v1435
    %2015 = vmatprep.subr.bf16.mxu0 0
    %2016 = vmatpush2.bf16.msra.mxu0 %v1434
    %2017 = vmatprep.mubr.bf16.mxu0 %v146
    %2018 = vmatmul.mubr.bf16.gmra.mxu0 %v145
    %v2019 = vpop.f32.mrf.mxu0
    %v2020 = vadd.f32 %v1979, %v2019
    %v2021 = vpop.f32.mrf.mxu0
    %v2022 = vpop.f32.mrf.mxu0
    %v2023 = vadd.f32 %v1982, %v2022
    %v2024 = vpop.f32.mrf.mxu0
    %2025 = vdwg.mxu0
    %2026 = vmatprep.subr.bf16.mxu0 0
    %2027 = vmatpush1.bf16.msra.mxu0 %v1449
    %2028 = vmatprep.subr.bf16.mxu0 0
    %2029 = vmatpush1.bf16.msra.mxu0 %v1448
    %2030 = vmatprep.subr.bf16.mxu0 0
    %2031 = vmatpush1.bf16.msra.mxu0 %v1447
    %2032 = vmatprep.subr.bf16.mxu0 0
    %2033 = vmatpush1.bf16.msra.mxu0 %v1446
    %2034 = vmatprep.subr.bf16.mxu0 0
    %2035 = vmatpush1.bf16.msra.mxu0 %v1445
    %2036 = vmatprep.subr.bf16.mxu0 0
    %2037 = vmatpush1.bf16.msra.mxu0 %v1444
    %2038 = vmatprep.subr.bf16.mxu0 0
    %2039 = vmatpush1.bf16.msra.mxu0 %v1443
    %2040 = vmatprep.subr.bf16.mxu0 0
    %2041 = vmatpush1.bf16.msra.mxu0 %v1442
    %2042 = vmatprep.subr.bf16.mxu0 0
    %2043 = vmatpush2.bf16.msra.mxu0 %v1457
    %2044 = vmatprep.subr.bf16.mxu0 0
    %2045 = vmatpush2.bf16.msra.mxu0 %v1456
    %2046 = vmatprep.subr.bf16.mxu0 0
    %2047 = vmatpush2.bf16.msra.mxu0 %v1455
    %2048 = vmatprep.subr.bf16.mxu0 0
    %2049 = vmatpush2.bf16.msra.mxu0 %v1454
    %2050 = vmatprep.subr.bf16.mxu0 0
    %2051 = vmatpush2.bf16.msra.mxu0 %v1453
    %2052 = vmatprep.subr.bf16.mxu0 0
    %2053 = vmatpush2.bf16.msra.mxu0 %v1452
    %2054 = vmatprep.subr.bf16.mxu0 0
    %2055 = vmatpush2.bf16.msra.mxu0 %v1451
    %2056 = vmatprep.subr.bf16.mxu0 0
    %2057 = vmatpush2.bf16.msra.mxu0 %v1450
    %2058 = vmatprep.mubr.bf16.mxu0 %v148
    %2059 = vmatmul.mubr.bf16.gmra.mxu0 %v147
    %v2060 = vpop.f32.mrf.mxu0
    %v2061 = vadd.f32 %v2020, %v2060
    %v2062 = vpop.f32.mrf.mxu0
    %v2063 = vpop.f32.mrf.mxu0
    %v2064 = vadd.f32 %v2023, %v2063
    %v2065 = vpop.f32.mrf.mxu0
    %2066 = vdwg.mxu0
    %2067 = vmatprep.subr.bf16.mxu0 0
    %2068 = vmatpush1.bf16.msra.mxu0 %v1465
    %2069 = vmatprep.subr.bf16.mxu0 0
    %2070 = vmatpush1.bf16.msra.mxu0 %v1464
    %2071 = vmatprep.subr.bf16.mxu0 0
    %2072 = vmatpush1.bf16.msra.mxu0 %v1463
    %2073 = vmatprep.subr.bf16.mxu0 0
    %2074 = vmatpush1.bf16.msra.mxu0 %v1462
    %2075 = vmatprep.subr.bf16.mxu0 0
    %2076 = vmatpush1.bf16.msra.mxu0 %v1461
    %2077 = vmatprep.subr.bf16.mxu0 0
    %2078 = vmatpush1.bf16.msra.mxu0 %v1460
    %2079 = vmatprep.subr.bf16.mxu0 0
    %2080 = vmatpush1.bf16.msra.mxu0 %v1459
    %2081 = vmatprep.subr.bf16.mxu0 0
    %2082 = vmatpush1.bf16.msra.mxu0 %v1458
    %2083 = vmatprep.subr.bf16.mxu0 0
    %2084 = vmatpush2.bf16.msra.mxu0 %v1473
    %2085 = vmatprep.subr.bf16.mxu0 0
    %2086 = vmatpush2.bf16.msra.mxu0 %v1472
    %2087 = vmatprep.subr.bf16.mxu0 0
    %2088 = vmatpush2.bf16.msra.mxu0 %v1471
    %2089 = vmatprep.subr.bf16.mxu0 0
    %2090 = vmatpush2.bf16.msra.mxu0 %v1470
    %2091 = vmatprep.subr.bf16.mxu0 0
    %2092 = vmatpush2.bf16.msra.mxu0 %v1469
    %2093 = vmatprep.subr.bf16.mxu0 0
    %2094 = vmatpush2.bf16.msra.mxu0 %v1468
    %2095 = vmatprep.subr.bf16.mxu0 0
    %2096 = vmatpush2.bf16.msra.mxu0 %v1467
    %2097 = vmatprep.subr.bf16.mxu0 0
    %2098 = vmatpush2.bf16.msra.mxu0 %v1466
    %2099 = vmatprep.mubr.bf16.mxu0 %v150
    %2100 = vmatmul.mubr.bf16.gmra.mxu0 %v149
    %v2101 = vpop.f32.mrf.mxu0
    %v2102 = vadd.f32 %v2061, %v2101
    %v2103 = vpop.f32.mrf.mxu0
    %v2104 = vpop.f32.mrf.mxu0
    %v2105 = vadd.f32 %v2064, %v2104
    %v2106 = vpop.f32.mrf.mxu0
    %2107 = vdwg.mxu0
    %2108 = vmatprep.subr.bf16.mxu0 0
    %2109 = vmatpush1.bf16.msra.mxu0 %v1481
    %2110 = vmatprep.subr.bf16.mxu0 0
    %2111 = vmatpush1.bf16.msra.mxu0 %v1480
    %2112 = vmatprep.subr.bf16.mxu0 0
    %2113 = vmatpush1.bf16.msra.mxu0 %v1479
    %2114 = vmatprep.subr.bf16.mxu0 0
    %2115 = vmatpush1.bf16.msra.mxu0 %v1478
    %2116 = vmatprep.subr.bf16.mxu0 0
    %2117 = vmatpush1.bf16.msra.mxu0 %v1477
    %2118 = vmatprep.subr.bf16.mxu0 0
    %2119 = vmatpush1.bf16.msra.mxu0 %v1476
    %2120 = vmatprep.subr.bf16.mxu0 0
    %2121 = vmatpush1.bf16.msra.mxu0 %v1475
    %2122 = vmatprep.subr.bf16.mxu0 0
    %2123 = vmatpush1.bf16.msra.mxu0 %v1474
    %2124 = vmatprep.subr.bf16.mxu0 0
    %2125 = vmatpush2.bf16.msra.mxu0 %v1489
    %2126 = vmatprep.subr.bf16.mxu0 0
    %2127 = vmatpush2.bf16.msra.mxu0 %v1488
    %2128 = vmatprep.subr.bf16.mxu0 0
    %2129 = vmatpush2.bf16.msra.mxu0 %v1487
    %2130 = vmatprep.subr.bf16.mxu0 0
    %2131 = vmatpush2.bf16.msra.mxu0 %v1486
    %2132 = vmatprep.subr.bf16.mxu0 0
    %2133 = vmatpush2.bf16.msra.mxu0 %v1485
    %2134 = vmatprep.subr.bf16.mxu0 0
    %2135 = vmatpush2.bf16.msra.mxu0 %v1484
    %2136 = vmatprep.subr.bf16.mxu0 0
    %2137 = vmatpush2.bf16.msra.mxu0 %v1483
    %2138 = vmatprep.subr.bf16.mxu0 0
    %2139 = vmatpush2.bf16.msra.mxu0 %v1482
    %2140 = vmatprep.mubr.bf16.mxu0 %v152
    %2141 = vmatmul.mubr.bf16.gmra.mxu0 %v151
    %v2142 = vpop.f32.mrf.mxu0
    %v2143 = vadd.f32 %v2102, %v2142
    %v2144 = vpop.f32.mrf.mxu0
    %v2145 = vpop.f32.mrf.mxu0
    %v2146 = vadd.f32 %v2105, %v2145
    %v2147 = vpop.f32.mrf.mxu0
    %2148 = vdwg.mxu0
    %2149 = vmatprep.subr.bf16.mxu0 0
    %2150 = vmatpush1.bf16.msra.mxu0 %v1497
    %2151 = vmatprep.subr.bf16.mxu0 0
    %2152 = vmatpush1.bf16.msra.mxu0 %v1496
    %2153 = vmatprep.subr.bf16.mxu0 0
    %2154 = vmatpush1.bf16.msra.mxu0 %v1495
    %2155 = vmatprep.subr.bf16.mxu0 0
    %2156 = vmatpush1.bf16.msra.mxu0 %v1494
    %2157 = vmatprep.subr.bf16.mxu0 0
    %2158 = vmatpush1.bf16.msra.mxu0 %v1493
    %2159 = vmatprep.subr.bf16.mxu0 0
    %2160 = vmatpush1.bf16.msra.mxu0 %v1492
    %2161 = vmatprep.subr.bf16.mxu0 0
    %2162 = vmatpush1.bf16.msra.mxu0 %v1491
    %2163 = vmatprep.subr.bf16.mxu0 0
    %2164 = vmatpush1.bf16.msra.mxu0 %v1490
    %2165 = vmatprep.subr.bf16.mxu0 0
    %2166 = vmatpush2.bf16.msra.mxu0 %v1505
    %2167 = vmatprep.subr.bf16.mxu0 0
    %2168 = vmatpush2.bf16.msra.mxu0 %v1504
    %2169 = vmatprep.subr.bf16.mxu0 0
    %2170 = vmatpush2.bf16.msra.mxu0 %v1503
    %2171 = vmatprep.subr.bf16.mxu0 0
    %2172 = vmatpush2.bf16.msra.mxu0 %v1502
    %2173 = vmatprep.subr.bf16.mxu0 0
    %2174 = vmatpush2.bf16.msra.mxu0 %v1501
    %2175 = vmatprep.subr.bf16.mxu0 0
    %2176 = vmatpush2.bf16.msra.mxu0 %v1500
    %2177 = vmatprep.subr.bf16.mxu0 0
    %2178 = vmatpush2.bf16.msra.mxu0 %v1499
    %2179 = vmatprep.subr.bf16.mxu0 0
    %2180 = vmatpush2.bf16.msra.mxu0 %v1498
    %2181 = vmatprep.mubr.bf16.mxu0 %v154
    %2182 = vmatmul.mubr.bf16.gmra.mxu0 %v153
    %v2183 = vpop.f32.mrf.mxu0
    %v2184 = vadd.f32 %v2143, %v2183
    %v2185 = vpop.f32.mrf.mxu0
    %v2186 = vpop.f32.mrf.mxu0
    %v2187 = vadd.f32 %v2146, %v2186
    %v2188 = vpop.f32.mrf.mxu0
    %2189 = vdwg.mxu0
    %v2190 = vmax.f32 %v2184, 0.0
    %v2191 = vmax.f32 %v2187, 0.0
    %v2192 = vpack.c.bf16 %v2191, %v2190
    %v2193 = vld [vmem:[#allocation7] sm:$0xf]
    %v2194 = vld [vmem:[#allocation7 + $0x4] sm:$0xf]
    %v2195 = vld [vmem:[#allocation7 + $0x8] sm:$0xf]
    %v2196 = vld [vmem:[#allocation7 + $0xc] sm:$0xf]
    %v2197 = vld [vmem:[#allocation7 + $0x10] sm:$0xf]
    %v2198 = vld [vmem:[#allocation7 + $0x14] sm:$0xf]
    %v2199 = vld [vmem:[#allocation7 + $0x18] sm:$0xf]
    %v2200 = vld [vmem:[#allocation7 + $0x1c] sm:$0xf]
    %v2201 = vld [vmem:[#allocation7 + $0x20] sm:$0xf]
    %v2202 = vld [vmem:[#allocation7 + $0x24] sm:$0xf]
    %v2203 = vld [vmem:[#allocation7 + $0x28] sm:$0xf]
    %v2204 = vld [vmem:[#allocation7 + $0x2c] sm:$0xf]
    %v2205 = vld [vmem:[#allocation7 + $0x30] sm:$0xf]
    %v2206 = vld [vmem:[#allocation7 + $0x34] sm:$0xf]
    %v2207 = vld [vmem:[#allocation7 + $0x38] sm:$0xf]
    %v2208 = vld [vmem:[#allocation7 + $0x3c] sm:$0xf]
    %v2209 = vld [vmem:[%s4] sm:$0x1]
    %v2211 = vlaneseq
    %v2212 = vshrl.u32 %v2211, 7
    %v2213 = vsub.s32 0, %v2212
    %v2214 = vrot.slane %v2209, %v2213
    %v2232 = vunpack.c.l.b16 %v2193
    %v2233 = vunpack.c.l.b16 %v2194
    %v2234 = vunpack.c.l.b16 %v2195
    %v2235 = vunpack.c.l.b16 %v2196
    %v2236 = vunpack.c.l.b16 %v2197
    %v2237 = vunpack.c.l.b16 %v2198
    %v2238 = vunpack.c.l.b16 %v2199
    %v2239 = vunpack.c.l.b16 %v2200
    %v2240 = vunpack.c.l.b16 %v2201
    %v2241 = vunpack.c.l.b16 %v2202
    %v2242 = vunpack.c.l.b16 %v2203
    %v2243 = vunpack.c.l.b16 %v2204
    %v2244 = vunpack.c.l.b16 %v2205
    %v2245 = vunpack.c.l.b16 %v2206
    %v2246 = vunpack.c.l.b16 %v2207
    %v2247 = vunpack.c.l.b16 %v2208
    %v2248 = vpack.c.b16 %v2233, %v2232
    %v2249 = vpack.c.b16 %v2235, %v2234
    %v2250 = vpack.c.b16 %v2237, %v2236
    %v2251 = vpack.c.b16 %v2239, %v2238
    %v2252 = vpack.c.b16 %v2241, %v2240
    %v2253 = vpack.c.b16 %v2243, %v2242
    %v2254 = vpack.c.b16 %v2245, %v2244
    %v2255 = vpack.c.b16 %v2247, %v2246
    %2264 = vmatprep.subr.bf16.mxu0 0
    %2265 = vmatpush1.bf16.msra.mxu0 %v2255
    %2266 = vmatprep.subr.bf16.mxu0 0
    %2267 = vmatpush1.bf16.msra.mxu0 %v2254
    %2268 = vmatprep.subr.bf16.mxu0 0
    %2269 = vmatpush1.bf16.msra.mxu0 %v2253
    %2270 = vmatprep.subr.bf16.mxu0 0
    %2271 = vmatpush1.bf16.msra.mxu0 %v2252
    %2272 = vmatprep.subr.bf16.mxu0 0
    %2273 = vmatpush1.bf16.msra.mxu0 %v2251
    %2274 = vmatprep.subr.bf16.mxu0 0
    %2275 = vmatpush1.bf16.msra.mxu0 %v2250
    %2276 = vmatprep.subr.bf16.mxu0 0
    %2277 = vmatpush1.bf16.msra.mxu0 %v2249
    %2278 = vmatprep.subr.bf16.mxu0 0
    %2279 = vmatpush1.bf16.msra.mxu0 %v2248
    %2280 = vmatprep.subr.bf16.mxu0 0
    %2281 = vmatpush2.bf16.msra.mxu0 0
    %2282 = vmatprep.subr.bf16.mxu0 0
    %2283 = vmatpush2.bf16.msra.mxu0 0
    %2284 = vmatprep.subr.bf16.mxu0 0
    %2285 = vmatpush2.bf16.msra.mxu0 0
    %2286 = vmatprep.subr.bf16.mxu0 0
    %2287 = vmatpush2.bf16.msra.mxu0 0
    %2288 = vmatprep.subr.bf16.mxu0 0
    %2289 = vmatpush2.bf16.msra.mxu0 0
    %2290 = vmatprep.subr.bf16.mxu0 0
    %2291 = vmatpush2.bf16.msra.mxu0 0
    %2292 = vmatprep.subr.bf16.mxu0 0
    %2293 = vmatpush2.bf16.msra.mxu0 0
    %2294 = vmatprep.subr.bf16.mxu0 0
    %2295 = vmatpush2.bf16.msra.mxu0 0
    %2296 = vmatprep.mubr.bf16.mxu0 0
    %2297 = vmatmul.mubr.bf16.gmra.mxu0 %v2192
    %v2298 = vpop.f32.mrf.mxu0
    %v2299 = vadd.f32 %v2214, %v2298
    %v2300 = vpop.f32.mrf.mxu0
    %v2301 = vpop.f32.mrf.mxu0
    %v2302 = vadd.f32 %v2214, %v2301
    %v2303 = vpop.f32.mrf.mxu0
    %2304 = vdwg.mxu0
    %v2305 = vmax.f32 %v2299, 0.0
    %v2306 = vmax.f32 %v2302, 0.0
    %v2307 = vpack.c.bf16 %v2306, %v2305
    %v2308 = vld [vmem:[#allocation8] sm:$0xf]
    %v2309 = vld [vmem:[#allocation8 + $0x4] sm:$0xf]
    %v2310 = vld [vmem:[#allocation8 + $0x8] sm:$0xf]
    %v2311 = vld [vmem:[#allocation8 + $0xc] sm:$0xf]
    %v2312 = vld [vmem:[#allocation8 + $0x10] sm:$0xf]
    %v2313 = vld [vmem:[#allocation8 + $0x14] sm:$0xf]
    %v2314 = vld [vmem:[#allocation8 + $0x18] sm:$0xf]
    %v2315 = vld [vmem:[#allocation8 + $0x1c] sm:$0xf]
    %v2316 = vld [vmem:[#allocation8 + $0x20] sm:$0xf]
    %v2317 = vld [vmem:[#allocation8 + $0x24] sm:$0xf]
    %v2318 = vld [vmem:[#allocation8 + $0x28] sm:$0xf]
    %v2319 = vld [vmem:[#allocation8 + $0x2c] sm:$0xf]
    %v2320 = vld [vmem:[#allocation8 + $0x30] sm:$0xf]
    %v2321 = vld [vmem:[#allocation8 + $0x34] sm:$0xf]
    %v2322 = vld [vmem:[#allocation8 + $0x38] sm:$0xf]
    %v2323 = vld [vmem:[#allocation8 + $0x3c] sm:$0xf]
    %v2324 = vld [vmem:[%s6] sm:$0x1]
    %v2326 = vlaneseq
    %v2327 = vshrl.u32 %v2326, 7
    %v2328 = vsub.s32 0, %v2327
    %v2329 = vrot.slane %v2324, %v2328
    %v2347 = vunpack.c.l.b16 %v2308
    %v2348 = vunpack.c.l.b16 %v2309
    %v2349 = vunpack.c.l.b16 %v2310
    %v2350 = vunpack.c.l.b16 %v2311
    %v2351 = vunpack.c.l.b16 %v2312
    %v2352 = vunpack.c.l.b16 %v2313
    %v2353 = vunpack.c.l.b16 %v2314
    %v2354 = vunpack.c.l.b16 %v2315
    %v2355 = vunpack.c.l.b16 %v2316
    %v2356 = vunpack.c.l.b16 %v2317
    %v2357 = vunpack.c.l.b16 %v2318
    %v2358 = vunpack.c.l.b16 %v2319
    %v2359 = vunpack.c.l.b16 %v2320
    %v2360 = vunpack.c.l.b16 %v2321
    %v2361 = vunpack.c.l.b16 %v2322
    %v2362 = vunpack.c.l.b16 %v2323
    %v2363 = vpack.c.b16 %v2348, %v2347
    %v2364 = vpack.c.b16 %v2350, %v2349
    %v2365 = vpack.c.b16 %v2352, %v2351
    %v2366 = vpack.c.b16 %v2354, %v2353
    %v2367 = vpack.c.b16 %v2356, %v2355
    %v2368 = vpack.c.b16 %v2358, %v2357
    %v2369 = vpack.c.b16 %v2360, %v2359
    %v2370 = vpack.c.b16 %v2362, %v2361
    %2379 = vmatprep.subr.bf16.mxu0 0
    %2380 = vmatpush1.bf16.msra.mxu0 %v2370
    %2381 = vmatprep.subr.bf16.mxu0 0
    %2382 = vmatpush1.bf16.msra.mxu0 %v2369
    %2383 = vmatprep.subr.bf16.mxu0 0
    %2384 = vmatpush1.bf16.msra.mxu0 %v2368
    %2385 = vmatprep.subr.bf16.mxu0 0
    %2386 = vmatpush1.bf16.msra.mxu0 %v2367
    %2387 = vmatprep.subr.bf16.mxu0 0
    %2388 = vmatpush1.bf16.msra.mxu0 %v2366
    %2389 = vmatprep.subr.bf16.mxu0 0
    %2390 = vmatpush1.bf16.msra.mxu0 %v2365
    %2391 = vmatprep.subr.bf16.mxu0 0
    %2392 = vmatpush1.bf16.msra.mxu0 %v2364
    %2393 = vmatprep.subr.bf16.mxu0 0
    %2394 = vmatpush1.bf16.msra.mxu0 %v2363
    %2395 = vmatprep.subr.bf16.mxu0 0
    %2396 = vmatpush2.bf16.msra.mxu0 0
    %2397 = vmatprep.subr.bf16.mxu0 0
    %2398 = vmatpush2.bf16.msra.mxu0 0
    %2399 = vmatprep.subr.bf16.mxu0 0
    %2400 = vmatpush2.bf16.msra.mxu0 0
    %2401 = vmatprep.subr.bf16.mxu0 0
    %2402 = vmatpush2.bf16.msra.mxu0 0
    %2403 = vmatprep.subr.bf16.mxu0 0
    %2404 = vmatpush2.bf16.msra.mxu0 0
    %2405 = vmatprep.subr.bf16.mxu0 0
    %2406 = vmatpush2.bf16.msra.mxu0 0
    %2407 = vmatprep.subr.bf16.mxu0 0
    %2408 = vmatpush2.bf16.msra.mxu0 0
    %2409 = vmatprep.subr.bf16.mxu0 0
    %2410 = vmatpush2.bf16.msra.mxu0 0
    %2411 = vmatprep.mubr.bf16.mxu0 0
    %2412 = vmatmul.mubr.bf16.gmra.mxu0 %v2307
    %v2413 = vpop.f32.mrf.mxu0
    %v2414 = vadd.f32 %v2329, %v2413
    %v2415 = vpop.f32.mrf.mxu0
    %v2416 = vpop.f32.mrf.mxu0
    %v2417 = vadd.f32 %v2329, %v2416
    %v2418 = vpop.f32.mrf.mxu0
    %2419 = vdwg.mxu0
    %v2420 = vpack.c.bf16 %v2417, %v2414
    %v2422 = vunpack.c.l.b16 %v2420
    %v2423 = vunpack.c.h.b16 %v2420
    %v2424 = vpack.c.b16 %v2422, %v2422
    %v2425 = vpack.c.b16 %v2423, %v2423
    %2428 = vst [vmem:[#allocation10] sm:$0xf] %v2424
    %2429 = vst [vmem:[#allocation10 + $0x4] sm:$0xf] %v2425
    // Predicated region
    $region46: #{tpu_custom_call.1} parent=1 // pred_check
      _
    $region47: #{tpu_custom_call.1} parent=1 // pred_check_branch
      %2431 = sbr.rel (0) target = $region49
    $region48: #{tpu_custom_call.1} parent=1 // pred_region
      %s2433 = ssub.s32 128, 128
      %2434 = vsyncadd [#allocation4], %s2433
      %s2435 = sshll.u32 [#allocation10], 4
      %s2436 = int_to_ptr.vmem [resolvable:$true] %s2435
      %2441 = dma.vmem_to_hbm [thread:$0]  %s2436, 128, %s7, [#allocation4], 64, 64, 4
    $region49: #{tpu_custom_call.1} parent=1 // pred_fallthru
      _
    // Predicated region
    $region50: #{tpu_custom_call.1} parent=1 // pred_check
      _
    $region51: #{tpu_custom_call.1} parent=1 // pred_check_branch
      %2443 = sbr.rel (0) target = $region53
    $region52: #{tpu_custom_call.1} parent=1 // pred_region
      %2444 = dma.done [#allocation4], 128
    $region53: #{tpu_custom_call.1} parent=1 // pred_fallthru
      _
    %2445 = vsyncpa [#allocation3], 1
    %2446 = vsyncpa [#allocation6], 1
    %2447 = vsyncpa [#allocation9], 1
    %2448 = vsyncpa [#allocation4], 1

</llo_original>
